<compile_context>
chip_gen: v5e
topology: v5e:2x2
jax: 0.10.0
libtpu: 0.0.40
codegen_flags: <defaults>
</compile_context>

<pallas_src>
import jax
import jax.numpy as jnp
from jax.experimental import pallas as pl
from jax.experimental.pallas import tpu as pltpu


def _round_up(x, m):
    return ((x + m - 1) // m) * m


def _gru_seq_kernel(x_ref, wih_ref, whh_ref, bih_ref, bhh_ref,
                    wlin_ref, blin_ref, out_ref, gi_ref):
    """Whole GRU sequence + 'Late' head in one kernel invocation."""
    TB, G = gi_ref.shape            # (T*B_PAD, 3*H_PAD)
    H_pad = G // 3
    B_pad, T_acc = out_ref.shape    # (8, 128) lane-dense full tile
    T = TB // B_pad

    # ---- Off the serial path: input projection for ALL time steps at once. ----
    gi_ref[...] = (jnp.dot(x_ref[...], wih_ref[...],
                           preferred_element_type=jnp.float32)
                   + bih_ref[...])

    # Hoisted broadcasts (JAX does not CSE broadcast_in_dim inside loops).
    b_hh = jnp.broadcast_to(bhh_ref[...], (B_pad, G))          # 3 vregs live
    w_lin = jnp.broadcast_to(wlin_ref[...], (B_pad, H_pad))    # 1 vreg live
    lane_ids = jax.lax.broadcasted_iota(jnp.int32, (B_pad, T_acc), 1)

    def step(t, carry):
        h, acc = carry                                          # h: (B_pad, H_pad) f32
        row = pl.multiple_of(t * B_pad, B_pad)                  # sublane-aligned
        gi = gi_ref[pl.ds(row, B_pad), :]                       # (B_pad, 3*H_pad)

        # Recurrent matmul: bf16 operands (single MXU pass), f32 accumulation.
        # whh_ref is read inside the step so its value does not stay live
        # across the unrolled loop.
        gh = jnp.dot(h.astype(jnp.bfloat16), whh_ref[...],
                     preferred_element_type=jnp.float32) + b_hh

        # Gates live on 128-lane boundaries -> free static vreg slices.
        i_r = gi[:, :H_pad]
        i_z = gi[:, H_pad:2 * H_pad]
        i_n = gi[:, 2 * H_pad:]
        h_r = gh[:, :H_pad]
        h_z = gh[:, H_pad:2 * H_pad]
        h_n = gh[:, 2 * H_pad:]

        r = jax.nn.sigmoid(i_r + h_r)
        z = jax.nn.sigmoid(i_z + h_z)
        n = jnp.tanh(i_n + r * h_n)
        h_new = (1.0 - z) * n + z * h

        # "Late" head pre-activation: VPU multiply + lane reduce + one select
        # into the lane-dense accumulator.  Depends only on h_new, so it
        # overlaps the next step's MXU weight pushes; no MXU/store/DMA here.
        y = jnp.sum(h_new * w_lin, axis=-1, keepdims=True)      # (B_pad, 1)
        acc = jnp.where(lane_ids == t, y, acc)
        return h_new, acc

    h0 = jnp.zeros((B_pad, H_pad), jnp.float32)
    acc0 = jnp.zeros((B_pad, T_acc), jnp.float32)
    unroll = True if T <= 16 else 8    # full unroll only for short sequences
    _, acc = jax.lax.fori_loop(0, T, step, (h0, acc0), unroll=unroll)

    # Single lane-dense, full-(8,128)-tile (unmasked) output write.
    out_ref[...] = jax.nn.sigmoid(acc + blin_ref[...])


def _prep_params(params, H, H_pad, D_pad):
    """Transpose weights and lay each gate out on a 128-lane boundary.

    Padded rows/columns and the padded tail of w_lin are zero, so padded
    hidden lanes stay exactly 0 given h0 = 0 and never leak into the head.
    """
    w_ih = params["w_ih"]               # (3H, D_in)  rows ordered [r; z; n]
    w_hh = params["w_hh"]               # (3H, H)

    def gates_to_lanes(w, k_pad):       # (3H, K) -> (k_pad, 3*H_pad)
        K = w.shape[1]
        wt = w.T
        out = jnp.zeros((k_pad, 3 * H_pad), jnp.float32)
        for g in range(3):
            out = out.at[:K, g * H_pad:g * H_pad + H].set(wt[:, g * H:(g + 1) * H])
        return out

    def gate_bias(b):                   # (3H,) -> (1, 3*H_pad)
        out = jnp.zeros((1, 3 * H_pad), jnp.float32)
        for g in range(3):
            out = out.at[0, g * H_pad:g * H_pad + H].set(b[g * H:(g + 1) * H])
        return out

    w_ih_p = gates_to_lanes(w_ih, D_pad)                         # (D_pad, 3*H_pad) f32
    w_hh_bf = gates_to_lanes(w_hh, H_pad).astype(jnp.bfloat16)   # (H_pad, 3*H_pad) bf16
    b_ih_p = gate_bias(params["b_ih"])
    b_hh_p = gate_bias(params["b_hh"])
    w_lin_p = jnp.zeros((1, H_pad), jnp.float32).at[:, :H].set(params["w_lin"])
    b_lin = params["b_lin"].reshape(1, 1).astype(jnp.float32)
    return w_ih_p, w_hh_bf, b_ih_p, b_hh_p, w_lin_p, b_lin


def ap_gru_lag_late_forward(V, params):
    """V: (B, T, D_in) float32, batch_first like PyTorch.  Returns (B, T)."""
    B, T, D_in = V.shape
    H = params["w_hh"].shape[1]
    H_PAD = _round_up(H, 128)          # 128 for H=40
    B_PAD = _round_up(B, 8)            # 8 for B=2
    T_ACC = _round_up(T, 128)          # 128 for T=8
    D_PAD = _round_up(D_in, 128)       # 128 for D_in=42

    (w_ih_p, w_hh_bf, b_ih_p, b_hh_p,
     w_lin_p, b_lin) = _prep_params(params, H, H_PAD, D_PAD)

    # Tiny layout prep (fused by XLA): time-major, batch padded to 8 sublanes,
    # features zero-padded to a 128-lane multiple, flattened so the kernel's
    # single pre-loop matmul covers all T*B_PAD rows at once.
    x_tm = jnp.transpose(V, (1, 0, 2)).astype(jnp.float32)       # (T, B, D_in)
    x_tm = jnp.pad(x_tm, ((0, 0), (0, B_PAD - B), (0, D_PAD - D_in)))
    x2d = x_tm.reshape(T * B_PAD, D_PAD)

    vmem = pl.BlockSpec(memory_space=pltpu.MemorySpace.VMEM)
    out = pl.pallas_call(
        _gru_seq_kernel,
        out_shape=jax.ShapeDtypeStruct((B_PAD, T_ACC), jnp.float32),
        in_specs=[vmem] * 7,
        out_specs=vmem,
        # TODO(synk): chunk this gi scratch (12 KiB per step) once T reaches
        # the low thousands so it stays inside v7x's 64 MiB VMEM.
        scratch_shapes=[pltpu.VMEM((T * B_PAD, 3 * H_PAD), jnp.float32)],
    )(x2d, w_ih_p, w_hh_bf, b_ih_p, b_hh_p, w_lin_p, b_lin)
    return out[:B, :T]


def _reference_forward(V, params):
    """Pure-JAX reference matching torch.nn.GRU + Linear + sigmoid."""
    B, T, _ = V.shape
    H = params["w_hh"].shape[1]
    w_ih, w_hh = params["w_ih"], params["w_hh"]
    b_ih, b_hh = params["b_ih"], params["b_hh"]

    def step(h, x_t):
        gi = x_t @ w_ih.T + b_ih
        gh = h @ w_hh.T + b_hh
        i_r, i_z, i_n = gi[:, :H], gi[:, H:2 * H], gi[:, 2 * H:]
        h_r, h_z, h_n = gh[:, :H], gh[:, H:2 * H], gh[:, 2 * H:]
        r = jax.nn.sigmoid(i_r + h_r)
        z = jax.nn.sigmoid(i_z + h_z)
        n = jnp.tanh(i_n + r * h_n)
        h_new = (1.0 - z) * n + z * h
        return h_new, h_new

    h0 = jnp.zeros((B, H), jnp.float32)
    _, hs = jax.lax.scan(step, h0, jnp.transpose(V, (1, 0, 2)))   # (T, B, H)
    rnn_out = jnp.transpose(hs, (1, 0, 2)).reshape(-1, H)
    lin = rnn_out @ params["w_lin"].T + params["b_lin"]
    return jax.nn.sigmoid(lin.reshape(B, T))


def make_params(key, H_no, lag):
    """Deterministic init, PyTorch-style U(-1/sqrt(H), 1/sqrt(H))."""
    D_in = 2 * (lag + 1)
    bound = 1.0 / jnp.sqrt(jnp.float32(H_no))
    ks = jax.random.split(key, 6)
    u = lambda k, shape: jax.random.uniform(k, shape, jnp.float32, -bound, bound)
    return {
        "w_ih": u(ks[0], (3 * H_no, D_in)),
        "w_hh": u(ks[1], (3 * H_no, H_no)),
        "b_ih": u(ks[2], (3 * H_no,)),
        "b_hh": u(ks[3], (3 * H_no,)),
        "w_lin": u(ks[4], (1, H_no)),
        "b_lin": u(ks[5], (1,)),
    }


if __name__ == "__main__":
    H_no = 40
    lag = 20
    B, T = 2, 8
    D_in = 2 * (lag + 1)   # 42

    key = jax.random.PRNGKey(0)
    kp, kx = jax.random.split(key)
    params = make_params(kp, H_no, lag)
    V = jax.random.normal(kx, (B, T, D_in), jnp.float32)

    fwd = jax.jit(ap_gru_lag_late_forward)
    out = jax.block_until_ready(fwd(V, params))

    ref = jax.block_until_ready(_reference_forward(V, params))
    assert out.shape == (B, T)
    # Recurrent matmul uses explicit bf16 MXU operands (f32 accumulate), so
    # tolerance vs the f32 (default-precision) reference is relaxed.
    assert jnp.allclose(out, ref, atol=2e-2, rtol=2e-2), "mismatch vs reference"

    print("KERNEL_OK")
</pallas_src>

<mosaic_0001>
module attributes {stable_mosaic.version = 11 : i64} {
  func.func @_gru_seq_kernel(%arg0: memref<64x128xf32, #tpu.memory_space<vmem>>, %arg1: memref<128x384xf32, #tpu.memory_space<vmem>>, %arg2: memref<128x384xbf16, #tpu.memory_space<vmem>>, %arg3: memref<1x384xf32, #tpu.memory_space<vmem>>, %arg4: memref<1x384xf32, #tpu.memory_space<vmem>>, %arg5: memref<1x128xf32, #tpu.memory_space<vmem>>, %arg6: memref<1x1xf32, #tpu.memory_space<vmem>>, %arg7: memref<8x128xf32, #tpu.memory_space<vmem>>, %arg8: memref<64x384xf32, #tpu.memory_space<vmem>>) attributes {dimension_semantics = [], scalar_prefetch = 0 : i64, scratch_operands = 1 : i64, tpu.core_type = #tpu.core_type<tc>} {
    %c0 = arith.constant 0 : index
    %c0_0 = arith.constant 0 : index
    %0 = vector.load %arg0[%c0, %c0_0] : memref<64x128xf32, #tpu.memory_space<vmem>>, vector<64x128xf32>
    %c0_1 = arith.constant 0 : index
    %c0_2 = arith.constant 0 : index
    %1 = vector.load %arg1[%c0_1, %c0_2] : memref<128x384xf32, #tpu.memory_space<vmem>>, vector<128x384xf32>
    %cst = arith.constant dense<0.000000e+00> : vector<64x384xf32>
    %2 = tpu.matmul %0, %1, %cst {dimension_numbers = #tpu.dot_dimension_numbers<[1], [0], [0], [1], [0, 0, 1, 1], [], []>} : vector<64x128xf32>, vector<128x384xf32>, vector<64x384xf32> -> vector<64x384xf32>
    %c0_3 = arith.constant 0 : index
    %c0_4 = arith.constant 0 : index
    %3 = vector.load %arg3[%c0_3, %c0_4] : memref<1x384xf32, #tpu.memory_space<vmem>>, vector<1x384xf32>
    %4 = vector.broadcast %3 : vector<1x384xf32> to vector<64x384xf32>
    %5 = arith.addf %2, %4 : vector<64x384xf32>
    %c0_5 = arith.constant 0 : index
    %c0_6 = arith.constant 0 : index
    %6 = vector.load %arg8[%c0_5, %c0_6] : memref<64x384xf32, #tpu.memory_space<vmem>>, vector<64x384xf32>
    tpu.vector_store %arg8[%c0_5, %c0_6], %5 {strides = array<i32>} : memref<64x384xf32, #tpu.memory_space<vmem>>, vector<64x384xf32>,
    %c0_7 = arith.constant 0 : index
    %c0_8 = arith.constant 0 : index
    %7 = vector.load %arg4[%c0_7, %c0_8] : memref<1x384xf32, #tpu.memory_space<vmem>>, vector<1x384xf32>
    %8 = vector.shape_cast %7 : vector<1x384xf32> to vector<1x384xf32>
    %9 = vector.broadcast %8 : vector<1x384xf32> to vector<8x384xf32>
    %c0_9 = arith.constant 0 : index
    %c0_10 = arith.constant 0 : index
    %10 = vector.load %arg5[%c0_9, %c0_10] : memref<1x128xf32, #tpu.memory_space<vmem>>, vector<1x128xf32>
    %11 = vector.shape_cast %10 : vector<1x128xf32> to vector<1x128xf32>
    %12 = vector.broadcast %11 : vector<1x128xf32> to vector<8x128xf32>
    %13 = tpu.iota {dimensions = array<i32: 1>} : vector<8x128xi32>
    %cst_11 = arith.constant 0.000000e+00 : f32
    %14 = vector.broadcast %cst_11 : f32 to vector<8x128xf32>
    %cst_12 = arith.constant 0.000000e+00 : f32
    %15 = vector.broadcast %cst_12 : f32 to vector<8x128xf32>
    %c0_i32 = arith.constant 0 : i32
    %c8_i32 = arith.constant 8 : i32
    %16 = arith.muli %c0_i32, %c8_i32 : i32
    %17 = tpu.assume_multiple %16, 8 : i32
    %18 = arith.index_cast %17 : i32 to index
    %c0_13 = arith.constant 0 : index
    %19 = vector.load %arg8[%18, %c0_13] : memref<64x384xf32, #tpu.memory_space<vmem>>, vector<8x384xf32>
    %20 = arith.truncf %14 : vector<8x128xf32> to vector<8x128xbf16>
    %c0_14 = arith.constant 0 : index
    %c0_15 = arith.constant 0 : index
    %21 = vector.load %arg2[%c0_14, %c0_15] : memref<128x384xbf16, #tpu.memory_space<vmem>>, vector<128x384xbf16>
    %cst_16 = arith.constant dense<0.000000e+00> : vector<8x384xf32>
    %22 = tpu.matmul %20, %21, %cst_16 {dimension_numbers = #tpu.dot_dimension_numbers<[1], [0], [0], [1], [0, 0, 1, 1], [], []>} : vector<8x128xbf16>, vector<128x384xbf16>, vector<8x384xf32> -> vector<8x384xf32>
    %23 = arith.addf %22, %9 : vector<8x384xf32>
    %24 = vector.extract_strided_slice %19 {offsets = [0, 0], sizes = [8, 128], strides = [1, 1]} : vector<8x384xf32> to vector<8x128xf32>
    %25 = vector.extract_strided_slice %19 {offsets = [0, 128], sizes = [8, 128], strides = [1, 1]} : vector<8x384xf32> to vector<8x128xf32>
    %26 = vector.extract_strided_slice %19 {offsets = [0, 256], sizes = [8, 128], strides = [1, 1]} : vector<8x384xf32> to vector<8x128xf32>
    %27 = vector.extract_strided_slice %23 {offsets = [0, 0], sizes = [8, 128], strides = [1, 1]} : vector<8x384xf32> to vector<8x128xf32>
    %28 = vector.extract_strided_slice %23 {offsets = [0, 128], sizes = [8, 128], strides = [1, 1]} : vector<8x384xf32> to vector<8x128xf32>
    %29 = vector.extract_strided_slice %23 {offsets = [0, 256], sizes = [8, 128], strides = [1, 1]} : vector<8x384xf32> to vector<8x128xf32>
    %30 = arith.addf %24, %27 : vector<8x128xf32>
    %31 = arith.negf %30 : vector<8x128xf32>
    %32 = math.exp %31 : vector<8x128xf32>
    %cst_17 = arith.constant 1.000000e+00 : f32
    %33 = vector.broadcast %cst_17 : f32 to vector<8x128xf32>
    %34 = arith.addf %33, %32 : vector<8x128xf32>
    %35 = arith.divf %33, %34 : vector<8x128xf32>
    %36 = arith.addf %25, %28 : vector<8x128xf32>
    %37 = arith.negf %36 : vector<8x128xf32>
    %38 = math.exp %37 : vector<8x128xf32>
    %cst_18 = arith.constant 1.000000e+00 : f32
    %39 = vector.broadcast %cst_18 : f32 to vector<8x128xf32>
    %40 = arith.addf %39, %38 : vector<8x128xf32>
    %41 = arith.divf %39, %40 : vector<8x128xf32>
    %42 = arith.mulf %35, %29 : vector<8x128xf32>
    %43 = arith.addf %26, %42 : vector<8x128xf32>
    %44 = math.tanh %43 : vector<8x128xf32>
    %cst_19 = arith.constant 1.000000e+00 : f32
    %45 = vector.broadcast %cst_19 : f32 to vector<8x128xf32>
    %46 = arith.subf %45, %41 : vector<8x128xf32>
    %47 = arith.mulf %46, %44 : vector<8x128xf32>
    %48 = arith.mulf %41, %14 : vector<8x128xf32>
    %49 = arith.addf %47, %48 : vector<8x128xf32>
    %50 = arith.mulf %49, %12 : vector<8x128xf32>
    %cst_20 = arith.constant dense<0.000000e+00> : vector<8xf32>
    %51 = vector.multi_reduction <add>, %50, %cst_20 [1] : vector<8x128xf32> to vector<8xf32>
    %52 = vector.shape_cast %51 : vector<8xf32> to vector<8x1xf32>
    %53 = vector.broadcast %c0_i32 : i32 to vector<8x128xi32>
    %54 = arith.cmpi eq, %13, %53 : vector<8x128xi32>
    %55 = vector.shape_cast %52 : vector<8x1xf32> to vector<8x1xf32>
    %56 = vector.broadcast %55 : vector<8x1xf32> to vector<8x128xf32>
    %57 = arith.select %54, %56, %15 : vector<8x128xi1>, vector<8x128xf32>
    %c1_i32 = arith.constant 1 : i32
    %c8_i32_21 = arith.constant 8 : i32
    %58 = arith.muli %c1_i32, %c8_i32_21 : i32
    %59 = tpu.assume_multiple %58, 8 : i32
    %60 = arith.index_cast %59 : i32 to index
    %c0_22 = arith.constant 0 : index
    %61 = vector.load %arg8[%60, %c0_22] : memref<64x384xf32, #tpu.memory_space<vmem>>, vector<8x384xf32>
    %62 = arith.truncf %49 : vector<8x128xf32> to vector<8x128xbf16>
    %c0_23 = arith.constant 0 : index
    %c0_24 = arith.constant 0 : index
    %63 = vector.load %arg2[%c0_23, %c0_24] : memref<128x384xbf16, #tpu.memory_space<vmem>>, vector<128x384xbf16>
    %cst_25 = arith.constant dense<0.000000e+00> : vector<8x384xf32>
    %64 = tpu.matmul %62, %63, %cst_25 {dimension_numbers = #tpu.dot_dimension_numbers<[1], [0], [0], [1], [0, 0, 1, 1], [], []>} : vector<8x128xbf16>, vector<128x384xbf16>, vector<8x384xf32> -> vector<8x384xf32>
    %65 = arith.addf %64, %9 : vector<8x384xf32>
    %66 = vector.extract_strided_slice %61 {offsets = [0, 0], sizes = [8, 128], strides = [1, 1]} : vector<8x384xf32> to vector<8x128xf32>
    %67 = vector.extract_strided_slice %61 {offsets = [0, 128], sizes = [8, 128], strides = [1, 1]} : vector<8x384xf32> to vector<8x128xf32>
    %68 = vector.extract_strided_slice %61 {offsets = [0, 256], sizes = [8, 128], strides = [1, 1]} : vector<8x384xf32> to vector<8x128xf32>
    %69 = vector.extract_strided_slice %65 {offsets = [0, 0], sizes = [8, 128], strides = [1, 1]} : vector<8x384xf32> to vector<8x128xf32>
    %70 = vector.extract_strided_slice %65 {offsets = [0, 128], sizes = [8, 128], strides = [1, 1]} : vector<8x384xf32> to vector<8x128xf32>
    %71 = vector.extract_strided_slice %65 {offsets = [0, 256], sizes = [8, 128], strides = [1, 1]} : vector<8x384xf32> to vector<8x128xf32>
    %72 = arith.addf %66, %69 : vector<8x128xf32>
    %73 = arith.negf %72 : vector<8x128xf32>
    %74 = math.exp %73 : vector<8x128xf32>
    %cst_26 = arith.constant 1.000000e+00 : f32
    %75 = vector.broadcast %cst_26 : f32 to vector<8x128xf32>
    %76 = arith.addf %75, %74 : vector<8x128xf32>
    %77 = arith.divf %75, %76 : vector<8x128xf32>
    %78 = arith.addf %67, %70 : vector<8x128xf32>
    %79 = arith.negf %78 : vector<8x128xf32>
    %80 = math.exp %79 : vector<8x128xf32>
    %cst_27 = arith.constant 1.000000e+00 : f32
    %81 = vector.broadcast %cst_27 : f32 to vector<8x128xf32>
    %82 = arith.addf %81, %80 : vector<8x128xf32>
    %83 = arith.divf %81, %82 : vector<8x128xf32>
    %84 = arith.mulf %77, %71 : vector<8x128xf32>
    %85 = arith.addf %68, %84 : vector<8x128xf32>
    %86 = math.tanh %85 : vector<8x128xf32>
    %cst_28 = arith.constant 1.000000e+00 : f32
    %87 = vector.broadcast %cst_28 : f32 to vector<8x128xf32>
    %88 = arith.subf %87, %83 : vector<8x128xf32>
    %89 = arith.mulf %88, %86 : vector<8x128xf32>
    %90 = arith.mulf %83, %49 : vector<8x128xf32>
    %91 = arith.addf %89, %90 : vector<8x128xf32>
    %92 = arith.mulf %91, %12 : vector<8x128xf32>
    %cst_29 = arith.constant dense<0.000000e+00> : vector<8xf32>
    %93 = vector.multi_reduction <add>, %92, %cst_29 [1] : vector<8x128xf32> to vector<8xf32>
    %94 = vector.shape_cast %93 : vector<8xf32> to vector<8x1xf32>
    %95 = vector.broadcast %c1_i32 : i32 to vector<8x128xi32>
    %96 = arith.cmpi eq, %13, %95 : vector<8x128xi32>
    %97 = vector.shape_cast %94 : vector<8x1xf32> to vector<8x1xf32>
    %98 = vector.broadcast %97 : vector<8x1xf32> to vector<8x128xf32>
    %99 = arith.select %96, %98, %57 : vector<8x128xi1>, vector<8x128xf32>
    %c2_i32 = arith.constant 2 : i32
    %c8_i32_30 = arith.constant 8 : i32
    %100 = arith.muli %c2_i32, %c8_i32_30 : i32
    %101 = tpu.assume_multiple %100, 8 : i32
    %102 = arith.index_cast %101 : i32 to index
    %c0_31 = arith.constant 0 : index
    %103 = vector.load %arg8[%102, %c0_31] : memref<64x384xf32, #tpu.memory_space<vmem>>, vector<8x384xf32>
    %104 = arith.truncf %91 : vector<8x128xf32> to vector<8x128xbf16>
    %c0_32 = arith.constant 0 : index
    %c0_33 = arith.constant 0 : index
    %105 = vector.load %arg2[%c0_32, %c0_33] : memref<128x384xbf16, #tpu.memory_space<vmem>>, vector<128x384xbf16>
    %cst_34 = arith.constant dense<0.000000e+00> : vector<8x384xf32>
    %106 = tpu.matmul %104, %105, %cst_34 {dimension_numbers = #tpu.dot_dimension_numbers<[1], [0], [0], [1], [0, 0, 1, 1], [], []>} : vector<8x128xbf16>, vector<128x384xbf16>, vector<8x384xf32> -> vector<8x384xf32>
    %107 = arith.addf %106, %9 : vector<8x384xf32>
    %108 = vector.extract_strided_slice %103 {offsets = [0, 0], sizes = [8, 128], strides = [1, 1]} : vector<8x384xf32> to vector<8x128xf32>
    %109 = vector.extract_strided_slice %103 {offsets = [0, 128], sizes = [8, 128], strides = [1, 1]} : vector<8x384xf32> to vector<8x128xf32>
    %110 = vector.extract_strided_slice %103 {offsets = [0, 256], sizes = [8, 128], strides = [1, 1]} : vector<8x384xf32> to vector<8x128xf32>
    %111 = vector.extract_strided_slice %107 {offsets = [0, 0], sizes = [8, 128], strides = [1, 1]} : vector<8x384xf32> to vector<8x128xf32>
    %112 = vector.extract_strided_slice %107 {offsets = [0, 128], sizes = [8, 128], strides = [1, 1]} : vector<8x384xf32> to vector<8x128xf32>
    %113 = vector.extract_strided_slice %107 {offsets = [0, 256], sizes = [8, 128], strides = [1, 1]} : vector<8x384xf32> to vector<8x128xf32>
    %114 = arith.addf %108, %111 : vector<8x128xf32>
    %115 = arith.negf %114 : vector<8x128xf32>
    %116 = math.exp %115 : vector<8x128xf32>
    %cst_35 = arith.constant 1.000000e+00 : f32
    %117 = vector.broadcast %cst_35 : f32 to vector<8x128xf32>
    %118 = arith.addf %117, %116 : vector<8x128xf32>
    %119 = arith.divf %117, %118 : vector<8x128xf32>
    %120 = arith.addf %109, %112 : vector<8x128xf32>
    %121 = arith.negf %120 : vector<8x128xf32>
    %122 = math.exp %121 : vector<8x128xf32>
    %cst_36 = arith.constant 1.000000e+00 : f32
    %123 = vector.broadcast %cst_36 : f32 to vector<8x128xf32>
    %124 = arith.addf %123, %122 : vector<8x128xf32>
    %125 = arith.divf %123, %124 : vector<8x128xf32>
    %126 = arith.mulf %119, %113 : vector<8x128xf32>
    %127 = arith.addf %110, %126 : vector<8x128xf32>
    %128 = math.tanh %127 : vector<8x128xf32>
    %cst_37 = arith.constant 1.000000e+00 : f32
    %129 = vector.broadcast %cst_37 : f32 to vector<8x128xf32>
    %130 = arith.subf %129, %125 : vector<8x128xf32>
    %131 = arith.mulf %130, %128 : vector<8x128xf32>
    %132 = arith.mulf %125, %91 : vector<8x128xf32>
    %133 = arith.addf %131, %132 : vector<8x128xf32>
    %134 = arith.mulf %133, %12 : vector<8x128xf32>
    %cst_38 = arith.constant dense<0.000000e+00> : vector<8xf32>
    %135 = vector.multi_reduction <add>, %134, %cst_38 [1] : vector<8x128xf32> to vector<8xf32>
    %136 = vector.shape_cast %135 : vector<8xf32> to vector<8x1xf32>
    %137 = vector.broadcast %c2_i32 : i32 to vector<8x128xi32>
    %138 = arith.cmpi eq, %13, %137 : vector<8x128xi32>
    %139 = vector.shape_cast %136 : vector<8x1xf32> to vector<8x1xf32>
    %140 = vector.broadcast %139 : vector<8x1xf32> to vector<8x128xf32>
    %141 = arith.select %138, %140, %99 : vector<8x128xi1>, vector<8x128xf32>
    %c3_i32 = arith.constant 3 : i32
    %c8_i32_39 = arith.constant 8 : i32
    %142 = arith.muli %c3_i32, %c8_i32_39 : i32
    %143 = tpu.assume_multiple %142, 8 : i32
    %144 = arith.index_cast %143 : i32 to index
    %c0_40 = arith.constant 0 : index
    %145 = vector.load %arg8[%144, %c0_40] : memref<64x384xf32, #tpu.memory_space<vmem>>, vector<8x384xf32>
    %146 = arith.truncf %133 : vector<8x128xf32> to vector<8x128xbf16>
    %c0_41 = arith.constant 0 : index
    %c0_42 = arith.constant 0 : index
    %147 = vector.load %arg2[%c0_41, %c0_42] : memref<128x384xbf16, #tpu.memory_space<vmem>>, vector<128x384xbf16>
    %cst_43 = arith.constant dense<0.000000e+00> : vector<8x384xf32>
    %148 = tpu.matmul %146, %147, %cst_43 {dimension_numbers = #tpu.dot_dimension_numbers<[1], [0], [0], [1], [0, 0, 1, 1], [], []>} : vector<8x128xbf16>, vector<128x384xbf16>, vector<8x384xf32> -> vector<8x384xf32>
    %149 = arith.addf %148, %9 : vector<8x384xf32>
    %150 = vector.extract_strided_slice %145 {offsets = [0, 0], sizes = [8, 128], strides = [1, 1]} : vector<8x384xf32> to vector<8x128xf32>
    %151 = vector.extract_strided_slice %145 {offsets = [0, 128], sizes = [8, 128], strides = [1, 1]} : vector<8x384xf32> to vector<8x128xf32>
    %152 = vector.extract_strided_slice %145 {offsets = [0, 256], sizes = [8, 128], strides = [1, 1]} : vector<8x384xf32> to vector<8x128xf32>
    %153 = vector.extract_strided_slice %149 {offsets = [0, 0], sizes = [8, 128], strides = [1, 1]} : vector<8x384xf32> to vector<8x128xf32>
    %154 = vector.extract_strided_slice %149 {offsets = [0, 128], sizes = [8, 128], strides = [1, 1]} : vector<8x384xf32> to vector<8x128xf32>
    %155 = vector.extract_strided_slice %149 {offsets = [0, 256], sizes = [8, 128], strides = [1, 1]} : vector<8x384xf32> to vector<8x128xf32>
    %156 = arith.addf %150, %153 : vector<8x128xf32>
    %157 = arith.negf %156 : vector<8x128xf32>
    %158 = math.exp %157 : vector<8x128xf32>
    %cst_44 = arith.constant 1.000000e+00 : f32
    %159 = vector.broadcast %cst_44 : f32 to vector<8x128xf32>
    %160 = arith.addf %159, %158 : vector<8x128xf32>
    %161 = arith.divf %159, %160 : vector<8x128xf32>
    %162 = arith.addf %151, %154 : vector<8x128xf32>
    %163 = arith.negf %162 : vector<8x128xf32>
    %164 = math.exp %163 : vector<8x128xf32>
    %cst_45 = arith.constant 1.000000e+00 : f32
    %165 = vector.broadcast %cst_45 : f32 to vector<8x128xf32>
    %166 = arith.addf %165, %164 : vector<8x128xf32>
    %167 = arith.divf %165, %166 : vector<8x128xf32>
    %168 = arith.mulf %161, %155 : vector<8x128xf32>
    %169 = arith.addf %152, %168 : vector<8x128xf32>
    %170 = math.tanh %169 : vector<8x128xf32>
    %cst_46 = arith.constant 1.000000e+00 : f32
    %171 = vector.broadcast %cst_46 : f32 to vector<8x128xf32>
    %172 = arith.subf %171, %167 : vector<8x128xf32>
    %173 = arith.mulf %172, %170 : vector<8x128xf32>
    %174 = arith.mulf %167, %133 : vector<8x128xf32>
    %175 = arith.addf %173, %174 : vector<8x128xf32>
    %176 = arith.mulf %175, %12 : vector<8x128xf32>
    %cst_47 = arith.constant dense<0.000000e+00> : vector<8xf32>
    %177 = vector.multi_reduction <add>, %176, %cst_47 [1] : vector<8x128xf32> to vector<8xf32>
    %178 = vector.shape_cast %177 : vector<8xf32> to vector<8x1xf32>
    %179 = vector.broadcast %c3_i32 : i32 to vector<8x128xi32>
    %180 = arith.cmpi eq, %13, %179 : vector<8x128xi32>
    %181 = vector.shape_cast %178 : vector<8x1xf32> to vector<8x1xf32>
    %182 = vector.broadcast %181 : vector<8x1xf32> to vector<8x128xf32>
    %183 = arith.select %180, %182, %141 : vector<8x128xi1>, vector<8x128xf32>
    %c4_i32 = arith.constant 4 : i32
    %c8_i32_48 = arith.constant 8 : i32
    %184 = arith.muli %c4_i32, %c8_i32_48 : i32
    %185 = tpu.assume_multiple %184, 8 : i32
    %186 = arith.index_cast %185 : i32 to index
    %c0_49 = arith.constant 0 : index
    %187 = vector.load %arg8[%186, %c0_49] : memref<64x384xf32, #tpu.memory_space<vmem>>, vector<8x384xf32>
    %188 = arith.truncf %175 : vector<8x128xf32> to vector<8x128xbf16>
    %c0_50 = arith.constant 0 : index
    %c0_51 = arith.constant 0 : index
    %189 = vector.load %arg2[%c0_50, %c0_51] : memref<128x384xbf16, #tpu.memory_space<vmem>>, vector<128x384xbf16>
    %cst_52 = arith.constant dense<0.000000e+00> : vector<8x384xf32>
    %190 = tpu.matmul %188, %189, %cst_52 {dimension_numbers = #tpu.dot_dimension_numbers<[1], [0], [0], [1], [0, 0, 1, 1], [], []>} : vector<8x128xbf16>, vector<128x384xbf16>, vector<8x384xf32> -> vector<8x384xf32>
    %191 = arith.addf %190, %9 : vector<8x384xf32>
    %192 = vector.extract_strided_slice %187 {offsets = [0, 0], sizes = [8, 128], strides = [1, 1]} : vector<8x384xf32> to vector<8x128xf32>
    %193 = vector.extract_strided_slice %187 {offsets = [0, 128], sizes = [8, 128], strides = [1, 1]} : vector<8x384xf32> to vector<8x128xf32>
    %194 = vector.extract_strided_slice %187 {offsets = [0, 256], sizes = [8, 128], strides = [1, 1]} : vector<8x384xf32> to vector<8x128xf32>
    %195 = vector.extract_strided_slice %191 {offsets = [0, 0], sizes = [8, 128], strides = [1, 1]} : vector<8x384xf32> to vector<8x128xf32>
    %196 = vector.extract_strided_slice %191 {offsets = [0, 128], sizes = [8, 128], strides = [1, 1]} : vector<8x384xf32> to vector<8x128xf32>
    %197 = vector.extract_strided_slice %191 {offsets = [0, 256], sizes = [8, 128], strides = [1, 1]} : vector<8x384xf32> to vector<8x128xf32>
    %198 = arith.addf %192, %195 : vector<8x128xf32>
    %199 = arith.negf %198 : vector<8x128xf32>
    %200 = math.exp %199 : vector<8x128xf32>
    %cst_53 = arith.constant 1.000000e+00 : f32
    %201 = vector.broadcast %cst_53 : f32 to vector<8x128xf32>
    %202 = arith.addf %201, %200 : vector<8x128xf32>
    %203 = arith.divf %201, %202 : vector<8x128xf32>
    %204 = arith.addf %193, %196 : vector<8x128xf32>
    %205 = arith.negf %204 : vector<8x128xf32>
    %206 = math.exp %205 : vector<8x128xf32>
    %cst_54 = arith.constant 1.000000e+00 : f32
    %207 = vector.broadcast %cst_54 : f32 to vector<8x128xf32>
    %208 = arith.addf %207, %206 : vector<8x128xf32>
    %209 = arith.divf %207, %208 : vector<8x128xf32>
    %210 = arith.mulf %203, %197 : vector<8x128xf32>
    %211 = arith.addf %194, %210 : vector<8x128xf32>
    %212 = math.tanh %211 : vector<8x128xf32>
    %cst_55 = arith.constant 1.000000e+00 : f32
    %213 = vector.broadcast %cst_55 : f32 to vector<8x128xf32>
    %214 = arith.subf %213, %209 : vector<8x128xf32>
    %215 = arith.mulf %214, %212 : vector<8x128xf32>
    %216 = arith.mulf %209, %175 : vector<8x128xf32>
    %217 = arith.addf %215, %216 : vector<8x128xf32>
    %218 = arith.mulf %217, %12 : vector<8x128xf32>
    %cst_56 = arith.constant dense<0.000000e+00> : vector<8xf32>
    %219 = vector.multi_reduction <add>, %218, %cst_56 [1] : vector<8x128xf32> to vector<8xf32>
    %220 = vector.shape_cast %219 : vector<8xf32> to vector<8x1xf32>
    %221 = vector.broadcast %c4_i32 : i32 to vector<8x128xi32>
    %222 = arith.cmpi eq, %13, %221 : vector<8x128xi32>
    %223 = vector.shape_cast %220 : vector<8x1xf32> to vector<8x1xf32>
    %224 = vector.broadcast %223 : vector<8x1xf32> to vector<8x128xf32>
    %225 = arith.select %222, %224, %183 : vector<8x128xi1>, vector<8x128xf32>
    %c5_i32 = arith.constant 5 : i32
    %c8_i32_57 = arith.constant 8 : i32
    %226 = arith.muli %c5_i32, %c8_i32_57 : i32
    %227 = tpu.assume_multiple %226, 8 : i32
    %228 = arith.index_cast %227 : i32 to index
    %c0_58 = arith.constant 0 : index
    %229 = vector.load %arg8[%228, %c0_58] : memref<64x384xf32, #tpu.memory_space<vmem>>, vector<8x384xf32>
    %230 = arith.truncf %217 : vector<8x128xf32> to vector<8x128xbf16>
    %c0_59 = arith.constant 0 : index
    %c0_60 = arith.constant 0 : index
    %231 = vector.load %arg2[%c0_59, %c0_60] : memref<128x384xbf16, #tpu.memory_space<vmem>>, vector<128x384xbf16>
    %cst_61 = arith.constant dense<0.000000e+00> : vector<8x384xf32>
    %232 = tpu.matmul %230, %231, %cst_61 {dimension_numbers = #tpu.dot_dimension_numbers<[1], [0], [0], [1], [0, 0, 1, 1], [], []>} : vector<8x128xbf16>, vector<128x384xbf16>, vector<8x384xf32> -> vector<8x384xf32>
    %233 = arith.addf %232, %9 : vector<8x384xf32>
    %234 = vector.extract_strided_slice %229 {offsets = [0, 0], sizes = [8, 128], strides = [1, 1]} : vector<8x384xf32> to vector<8x128xf32>
    %235 = vector.extract_strided_slice %229 {offsets = [0, 128], sizes = [8, 128], strides = [1, 1]} : vector<8x384xf32> to vector<8x128xf32>
    %236 = vector.extract_strided_slice %229 {offsets = [0, 256], sizes = [8, 128], strides = [1, 1]} : vector<8x384xf32> to vector<8x128xf32>
    %237 = vector.extract_strided_slice %233 {offsets = [0, 0], sizes = [8, 128], strides = [1, 1]} : vector<8x384xf32> to vector<8x128xf32>
    %238 = vector.extract_strided_slice %233 {offsets = [0, 128], sizes = [8, 128], strides = [1, 1]} : vector<8x384xf32> to vector<8x128xf32>
    %239 = vector.extract_strided_slice %233 {offsets = [0, 256], sizes = [8, 128], strides = [1, 1]} : vector<8x384xf32> to vector<8x128xf32>
    %240 = arith.addf %234, %237 : vector<8x128xf32>
    %241 = arith.negf %240 : vector<8x128xf32>
    %242 = math.exp %241 : vector<8x128xf32>
    %cst_62 = arith.constant 1.000000e+00 : f32
    %243 = vector.broadcast %cst_62 : f32 to vector<8x128xf32>
    %244 = arith.addf %243, %242 : vector<8x128xf32>
    %245 = arith.divf %243, %244 : vector<8x128xf32>
    %246 = arith.addf %235, %238 : vector<8x128xf32>
    %247 = arith.negf %246 : vector<8x128xf32>
    %248 = math.exp %247 : vector<8x128xf32>
    %cst_63 = arith.constant 1.000000e+00 : f32
    %249 = vector.broadcast %cst_63 : f32 to vector<8x128xf32>
    %250 = arith.addf %249, %248 : vector<8x128xf32>
    %251 = arith.divf %249, %250 : vector<8x128xf32>
    %252 = arith.mulf %245, %239 : vector<8x128xf32>
    %253 = arith.addf %236, %252 : vector<8x128xf32>
    %254 = math.tanh %253 : vector<8x128xf32>
    %cst_64 = arith.constant 1.000000e+00 : f32
    %255 = vector.broadcast %cst_64 : f32 to vector<8x128xf32>
    %256 = arith.subf %255, %251 : vector<8x128xf32>
    %257 = arith.mulf %256, %254 : vector<8x128xf32>
    %258 = arith.mulf %251, %217 : vector<8x128xf32>
    %259 = arith.addf %257, %258 : vector<8x128xf32>
    %260 = arith.mulf %259, %12 : vector<8x128xf32>
    %cst_65 = arith.constant dense<0.000000e+00> : vector<8xf32>
    %261 = vector.multi_reduction <add>, %260, %cst_65 [1] : vector<8x128xf32> to vector<8xf32>
    %262 = vector.shape_cast %261 : vector<8xf32> to vector<8x1xf32>
    %263 = vector.broadcast %c5_i32 : i32 to vector<8x128xi32>
    %264 = arith.cmpi eq, %13, %263 : vector<8x128xi32>
    %265 = vector.shape_cast %262 : vector<8x1xf32> to vector<8x1xf32>
    %266 = vector.broadcast %265 : vector<8x1xf32> to vector<8x128xf32>
    %267 = arith.select %264, %266, %225 : vector<8x128xi1>, vector<8x128xf32>
    %c6_i32 = arith.constant 6 : i32
    %c8_i32_66 = arith.constant 8 : i32
    %268 = arith.muli %c6_i32, %c8_i32_66 : i32
    %269 = tpu.assume_multiple %268, 8 : i32
    %270 = arith.index_cast %269 : i32 to index
    %c0_67 = arith.constant 0 : index
    %271 = vector.load %arg8[%270, %c0_67] : memref<64x384xf32, #tpu.memory_space<vmem>>, vector<8x384xf32>
    %272 = arith.truncf %259 : vector<8x128xf32> to vector<8x128xbf16>
    %c0_68 = arith.constant 0 : index
    %c0_69 = arith.constant 0 : index
    %273 = vector.load %arg2[%c0_68, %c0_69] : memref<128x384xbf16, #tpu.memory_space<vmem>>, vector<128x384xbf16>
    %cst_70 = arith.constant dense<0.000000e+00> : vector<8x384xf32>
    %274 = tpu.matmul %272, %273, %cst_70 {dimension_numbers = #tpu.dot_dimension_numbers<[1], [0], [0], [1], [0, 0, 1, 1], [], []>} : vector<8x128xbf16>, vector<128x384xbf16>, vector<8x384xf32> -> vector<8x384xf32>
    %275 = arith.addf %274, %9 : vector<8x384xf32>
    %276 = vector.extract_strided_slice %271 {offsets = [0, 0], sizes = [8, 128], strides = [1, 1]} : vector<8x384xf32> to vector<8x128xf32>
    %277 = vector.extract_strided_slice %271 {offsets = [0, 128], sizes = [8, 128], strides = [1, 1]} : vector<8x384xf32> to vector<8x128xf32>
    %278 = vector.extract_strided_slice %271 {offsets = [0, 256], sizes = [8, 128], strides = [1, 1]} : vector<8x384xf32> to vector<8x128xf32>
    %279 = vector.extract_strided_slice %275 {offsets = [0, 0], sizes = [8, 128], strides = [1, 1]} : vector<8x384xf32> to vector<8x128xf32>
    %280 = vector.extract_strided_slice %275 {offsets = [0, 128], sizes = [8, 128], strides = [1, 1]} : vector<8x384xf32> to vector<8x128xf32>
    %281 = vector.extract_strided_slice %275 {offsets = [0, 256], sizes = [8, 128], strides = [1, 1]} : vector<8x384xf32> to vector<8x128xf32>
    %282 = arith.addf %276, %279 : vector<8x128xf32>
    %283 = arith.negf %282 : vector<8x128xf32>
    %284 = math.exp %283 : vector<8x128xf32>
    %cst_71 = arith.constant 1.000000e+00 : f32
    %285 = vector.broadcast %cst_71 : f32 to vector<8x128xf32>
    %286 = arith.addf %285, %284 : vector<8x128xf32>
    %287 = arith.divf %285, %286 : vector<8x128xf32>
    %288 = arith.addf %277, %280 : vector<8x128xf32>
    %289 = arith.negf %288 : vector<8x128xf32>
    %290 = math.exp %289 : vector<8x128xf32>
    %cst_72 = arith.constant 1.000000e+00 : f32
    %291 = vector.broadcast %cst_72 : f32 to vector<8x128xf32>
    %292 = arith.addf %291, %290 : vector<8x128xf32>
    %293 = arith.divf %291, %292 : vector<8x128xf32>
    %294 = arith.mulf %287, %281 : vector<8x128xf32>
    %295 = arith.addf %278, %294 : vector<8x128xf32>
    %296 = math.tanh %295 : vector<8x128xf32>
    %cst_73 = arith.constant 1.000000e+00 : f32
    %297 = vector.broadcast %cst_73 : f32 to vector<8x128xf32>
    %298 = arith.subf %297, %293 : vector<8x128xf32>
    %299 = arith.mulf %298, %296 : vector<8x128xf32>
    %300 = arith.mulf %293, %259 : vector<8x128xf32>
    %301 = arith.addf %299, %300 : vector<8x128xf32>
    %302 = arith.mulf %301, %12 : vector<8x128xf32>
    %cst_74 = arith.constant dense<0.000000e+00> : vector<8xf32>
    %303 = vector.multi_reduction <add>, %302, %cst_74 [1] : vector<8x128xf32> to vector<8xf32>
    %304 = vector.shape_cast %303 : vector<8xf32> to vector<8x1xf32>
    %305 = vector.broadcast %c6_i32 : i32 to vector<8x128xi32>
    %306 = arith.cmpi eq, %13, %305 : vector<8x128xi32>
    %307 = vector.shape_cast %304 : vector<8x1xf32> to vector<8x1xf32>
    %308 = vector.broadcast %307 : vector<8x1xf32> to vector<8x128xf32>
    %309 = arith.select %306, %308, %267 : vector<8x128xi1>, vector<8x128xf32>
    %c7_i32 = arith.constant 7 : i32
    %c8_i32_75 = arith.constant 8 : i32
    %310 = arith.muli %c7_i32, %c8_i32_75 : i32
    %311 = tpu.assume_multiple %310, 8 : i32
    %312 = arith.index_cast %311 : i32 to index
    %c0_76 = arith.constant 0 : index
    %313 = vector.load %arg8[%312, %c0_76] : memref<64x384xf32, #tpu.memory_space<vmem>>, vector<8x384xf32>
    %314 = arith.truncf %301 : vector<8x128xf32> to vector<8x128xbf16>
    %c0_77 = arith.constant 0 : index
    %c0_78 = arith.constant 0 : index
    %315 = vector.load %arg2[%c0_77, %c0_78] : memref<128x384xbf16, #tpu.memory_space<vmem>>, vector<128x384xbf16>
    %cst_79 = arith.constant dense<0.000000e+00> : vector<8x384xf32>
    %316 = tpu.matmul %314, %315, %cst_79 {dimension_numbers = #tpu.dot_dimension_numbers<[1], [0], [0], [1], [0, 0, 1, 1], [], []>} : vector<8x128xbf16>, vector<128x384xbf16>, vector<8x384xf32> -> vector<8x384xf32>
    %317 = arith.addf %316, %9 : vector<8x384xf32>
    %318 = vector.extract_strided_slice %313 {offsets = [0, 0], sizes = [8, 128], strides = [1, 1]} : vector<8x384xf32> to vector<8x128xf32>
    %319 = vector.extract_strided_slice %313 {offsets = [0, 128], sizes = [8, 128], strides = [1, 1]} : vector<8x384xf32> to vector<8x128xf32>
    %320 = vector.extract_strided_slice %313 {offsets = [0, 256], sizes = [8, 128], strides = [1, 1]} : vector<8x384xf32> to vector<8x128xf32>
    %321 = vector.extract_strided_slice %317 {offsets = [0, 0], sizes = [8, 128], strides = [1, 1]} : vector<8x384xf32> to vector<8x128xf32>
    %322 = vector.extract_strided_slice %317 {offsets = [0, 128], sizes = [8, 128], strides = [1, 1]} : vector<8x384xf32> to vector<8x128xf32>
    %323 = vector.extract_strided_slice %317 {offsets = [0, 256], sizes = [8, 128], strides = [1, 1]} : vector<8x384xf32> to vector<8x128xf32>
    %324 = arith.addf %318, %321 : vector<8x128xf32>
    %325 = arith.negf %324 : vector<8x128xf32>
    %326 = math.exp %325 : vector<8x128xf32>
    %cst_80 = arith.constant 1.000000e+00 : f32
    %327 = vector.broadcast %cst_80 : f32 to vector<8x128xf32>
    %328 = arith.addf %327, %326 : vector<8x128xf32>
    %329 = arith.divf %327, %328 : vector<8x128xf32>
    %330 = arith.addf %319, %322 : vector<8x128xf32>
    %331 = arith.negf %330 : vector<8x128xf32>
    %332 = math.exp %331 : vector<8x128xf32>
    %cst_81 = arith.constant 1.000000e+00 : f32
    %333 = vector.broadcast %cst_81 : f32 to vector<8x128xf32>
    %334 = arith.addf %333, %332 : vector<8x128xf32>
    %335 = arith.divf %333, %334 : vector<8x128xf32>
    %336 = arith.mulf %329, %323 : vector<8x128xf32>
    %337 = arith.addf %320, %336 : vector<8x128xf32>
    %338 = math.tanh %337 : vector<8x128xf32>
    %cst_82 = arith.constant 1.000000e+00 : f32
    %339 = vector.broadcast %cst_82 : f32 to vector<8x128xf32>
    %340 = arith.subf %339, %335 : vector<8x128xf32>
    %341 = arith.mulf %340, %338 : vector<8x128xf32>
    %342 = arith.mulf %335, %301 : vector<8x128xf32>
    %343 = arith.addf %341, %342 : vector<8x128xf32>
    %344 = arith.mulf %343, %12 : vector<8x128xf32>
    %cst_83 = arith.constant dense<0.000000e+00> : vector<8xf32>
    %345 = vector.multi_reduction <add>, %344, %cst_83 [1] : vector<8x128xf32> to vector<8xf32>
    %346 = vector.shape_cast %345 : vector<8xf32> to vector<8x1xf32>
    %347 = vector.broadcast %c7_i32 : i32 to vector<8x128xi32>
    %348 = arith.cmpi eq, %13, %347 : vector<8x128xi32>
    %349 = vector.shape_cast %346 : vector<8x1xf32> to vector<8x1xf32>
    %350 = vector.broadcast %349 : vector<8x1xf32> to vector<8x128xf32>
    %351 = arith.select %348, %350, %309 : vector<8x128xi1>, vector<8x128xf32>
    %c8_i32_84 = arith.constant 8 : i32
    %c0_85 = arith.constant 0 : index
    %c0_86 = arith.constant 0 : index
    %352 = vector.load %arg6[%c0_85, %c0_86] : memref<1x1xf32, #tpu.memory_space<vmem>>, vector<1x1xf32>
    %353 = vector.broadcast %352 : vector<1x1xf32> to vector<8x128xf32>
    %354 = arith.addf %351, %353 : vector<8x128xf32>
    %355 = arith.negf %354 : vector<8x128xf32>
    %356 = math.exp %355 : vector<8x128xf32>
    %cst_87 = arith.constant 1.000000e+00 : f32
    %357 = vector.broadcast %cst_87 : f32 to vector<8x128xf32>
    %358 = arith.addf %357, %356 : vector<8x128xf32>
    %359 = arith.divf %357, %358 : vector<8x128xf32>
    %c0_88 = arith.constant 0 : index
    %c0_89 = arith.constant 0 : index
    %360 = vector.load %arg7[%c0_88, %c0_89] : memref<8x128xf32, #tpu.memory_space<vmem>>, vector<8x128xf32>
    tpu.vector_store %arg7[%c0_88, %c0_89], %359 {strides = array<i32>} : memref<8x128xf32, #tpu.memory_space<vmem>>, vector<8x128xf32>,
    return
  }
}

</mosaic_0001>

<llo_original>
// kernel: ap_gru_lag_late_forward.1
$region0: #{ap_gru_lag_late_forward.1}
  #allocation0 [shape = 'u32[]', space=smem, size = 0x4, offset = 0x4, fixed_abs, tag = 'smem constant byte address 0x4 - core index']
  #allocation1 [shape = 'u32[72,128]{1,0:T(1,128)}', space=vmem, size = 0x9000, scoped, tag = 'internal scratch']
  #allocation2 [shape = 'f32[64,384]{1,0:T(8,128)}', space=vmem, size = 0x18000, scoped, tag = 'scratch operand']
  #allocation3 [shape = 'f32[1,1]{1,0:T(1,128)S(1)}', space=vmem, size = 0x200, scoped, tag = 'scoped memory for ap_gru_lag_late_forward.1']
  %s0 = inlined_call_operand.vmem [shape: f32[64,128], index: 0, kind: input, shape index: {}]
  %s1 = inlined_call_operand.vmem [shape: f32[128,384], index: 1, kind: input, shape index: {}]
  %s2 = inlined_call_operand.vmem [shape: bf16[128,384], index: 2, kind: input, shape index: {}]
  %s3 = inlined_call_operand.vmem [shape: f32[1,384], index: 3, kind: input, shape index: {}]
  %s4 = inlined_call_operand.vmem [shape: f32[1,384], index: 4, kind: input, shape index: {}]
  %s5 = inlined_call_operand.vmem [shape: f32[1,128], index: 5, kind: input, shape index: {}]
  %s6 = inlined_call_operand.<no memory space> [shape: f32[1,1], index: 6, kind: input, shape index: {}]
  %s7 = inlined_call_operand.vmem [shape: f32[8,128], index: 7, kind: output, shape index: {}]
  %s8 = sld [smem:[#allocation0]]
  $region38: #{ap_gru_lag_late_forward.1} parent=0
    _
  %s10 = ssub.s32 1, %s8
  %s11 = scalar_select 0, %s10, %s8
  %v12 = vstv %s6
  %13 = vst [vmem:[#allocation3] sm:$0x1] %v12
  // Predicated region
  $region2: #{ap_gru_lag_late_forward.1} parent=0 // pred_check
    _
  $region3: #{ap_gru_lag_late_forward.1} parent=0 // pred_check_branch
    %15 = sbr.rel (0) target = $region5
  $region4: #{ap_gru_lag_late_forward.1} parent=0 // pred_region
    _
  $region5: #{ap_gru_lag_late_forward.1} parent=0 // pred_fallthru
    _
  // Predicated region
  $region6: #{ap_gru_lag_late_forward.1} parent=0 // pred_check
    _
  $region7: #{ap_gru_lag_late_forward.1} parent=0 // pred_check_branch
    %17 = sbr.rel (0) target = $region9
  $region8: #{ap_gru_lag_late_forward.1} parent=0 // pred_region
    _
  $region9: #{ap_gru_lag_late_forward.1} parent=0 // pred_fallthru
    _
  // Predicated region
  $region10: #{ap_gru_lag_late_forward.1} parent=0 // pred_check
    _
  $region11: #{ap_gru_lag_late_forward.1} parent=0 // pred_check_branch
    %19 = sbr.rel (0) target = $region13
  $region12: #{ap_gru_lag_late_forward.1} parent=0 // pred_region
    _
  $region13: #{ap_gru_lag_late_forward.1} parent=0 // pred_fallthru
    _
  // Predicated region
  $region14: #{ap_gru_lag_late_forward.1} parent=0 // pred_check
    _
  $region15: #{ap_gru_lag_late_forward.1} parent=0 // pred_check_branch
    %21 = sbr.rel (0) target = $region17
  $region16: #{ap_gru_lag_late_forward.1} parent=0 // pred_region
    _
  $region17: #{ap_gru_lag_late_forward.1} parent=0 // pred_fallthru
    _
  // Predicated region
  $region18: #{ap_gru_lag_late_forward.1} parent=0 // pred_check
    _
  $region19: #{ap_gru_lag_late_forward.1} parent=0 // pred_check_branch
    %23 = sbr.rel (0) target = $region21
  $region20: #{ap_gru_lag_late_forward.1} parent=0 // pred_region
    _
  $region21: #{ap_gru_lag_late_forward.1} parent=0 // pred_fallthru
    _
  // Predicated region
  $region22: #{ap_gru_lag_late_forward.1} parent=0 // pred_check
    _
  $region23: #{ap_gru_lag_late_forward.1} parent=0 // pred_check_branch
    %25 = sbr.rel (0) target = $region25
  $region24: #{ap_gru_lag_late_forward.1} parent=0 // pred_region
    _
  $region25: #{ap_gru_lag_late_forward.1} parent=0 // pred_fallthru
    _
  // Predicated region
  $region26: #{ap_gru_lag_late_forward.1} parent=0 // pred_check
    _
  $region27: #{ap_gru_lag_late_forward.1} parent=0 // pred_check_branch
    %27 = sbr.rel (0) target = $region29
  $region28: #{ap_gru_lag_late_forward.1} parent=0 // pred_region
    _
  $region29: #{ap_gru_lag_late_forward.1} parent=0 // pred_fallthru
    _
  %v29 = vld [vmem:[%s0] sm:$0xff]
  %v30 = vld [vmem:[%s0 + $0x8] sm:$0xff]
  %v31 = vld [vmem:[%s0 + $0x10] sm:$0xff]
  %v32 = vld [vmem:[%s0 + $0x18] sm:$0xff]
  %v33 = vld [vmem:[%s0 + $0x20] sm:$0xff]
  %v34 = vld [vmem:[%s0 + $0x28] sm:$0xff]
  %v35 = vld [vmem:[%s0 + $0x30] sm:$0xff]
  %v36 = vld [vmem:[%s0 + $0x38] sm:$0xff]
  %v37 = vld [vmem:[%s1] sm:$0xff]
  %v38 = vld [vmem:[%s1 + $0x8] sm:$0xff]
  %v39 = vld [vmem:[%s1 + $0x10] sm:$0xff]
  %v40 = vld [vmem:[%s1 + $0x18] sm:$0xff]
  %v41 = vld [vmem:[%s1 + $0x20] sm:$0xff]
  %v42 = vld [vmem:[%s1 + $0x28] sm:$0xff]
  %v43 = vld [vmem:[%s1 + $0x30] sm:$0xff]
  %v44 = vld [vmem:[%s1 + $0x38] sm:$0xff]
  %v45 = vld [vmem:[%s1 + $0x40] sm:$0xff]
  %v46 = vld [vmem:[%s1 + $0x48] sm:$0xff]
  %v47 = vld [vmem:[%s1 + $0x50] sm:$0xff]
  %v48 = vld [vmem:[%s1 + $0x58] sm:$0xff]
  %v49 = vld [vmem:[%s1 + $0x60] sm:$0xff]
  %v50 = vld [vmem:[%s1 + $0x68] sm:$0xff]
  %v51 = vld [vmem:[%s1 + $0x70] sm:$0xff]
  %v52 = vld [vmem:[%s1 + $0x78] sm:$0xff]
  %v53 = vld [vmem:[%s1 + $0x80] sm:$0xff]
  %v54 = vld [vmem:[%s1 + $0x88] sm:$0xff]
  %v55 = vld [vmem:[%s1 + $0x90] sm:$0xff]
  %v56 = vld [vmem:[%s1 + $0x98] sm:$0xff]
  %v57 = vld [vmem:[%s1 + $0xa0] sm:$0xff]
  %v58 = vld [vmem:[%s1 + $0xa8] sm:$0xff]
  %v59 = vld [vmem:[%s1 + $0xb0] sm:$0xff]
  %v60 = vld [vmem:[%s1 + $0xb8] sm:$0xff]
  %v61 = vld [vmem:[%s1 + $0xc0] sm:$0xff]
  %v62 = vld [vmem:[%s1 + $0xc8] sm:$0xff]
  %v63 = vld [vmem:[%s1 + $0xd0] sm:$0xff]
  %v64 = vld [vmem:[%s1 + $0xd8] sm:$0xff]
  %v65 = vld [vmem:[%s1 + $0xe0] sm:$0xff]
  %v66 = vld [vmem:[%s1 + $0xe8] sm:$0xff]
  %v67 = vld [vmem:[%s1 + $0xf0] sm:$0xff]
  %v68 = vld [vmem:[%s1 + $0xf8] sm:$0xff]
  %v69 = vld [vmem:[%s1 + $0x100] sm:$0xff]
  %v70 = vld [vmem:[%s1 + $0x108] sm:$0xff]
  %v71 = vld [vmem:[%s1 + $0x110] sm:$0xff]
  %v72 = vld [vmem:[%s1 + $0x118] sm:$0xff]
  %v73 = vld [vmem:[%s1 + $0x120] sm:$0xff]
  %v74 = vld [vmem:[%s1 + $0x128] sm:$0xff]
  %v75 = vld [vmem:[%s1 + $0x130] sm:$0xff]
  %v76 = vld [vmem:[%s1 + $0x138] sm:$0xff]
  %v77 = vld [vmem:[%s1 + $0x140] sm:$0xff]
  %v78 = vld [vmem:[%s1 + $0x148] sm:$0xff]
  %v79 = vld [vmem:[%s1 + $0x150] sm:$0xff]
  %v80 = vld [vmem:[%s1 + $0x158] sm:$0xff]
  %v81 = vld [vmem:[%s1 + $0x160] sm:$0xff]
  %v82 = vld [vmem:[%s1 + $0x168] sm:$0xff]
  %v83 = vld [vmem:[%s1 + $0x170] sm:$0xff]
  %v84 = vld [vmem:[%s1 + $0x178] sm:$0xff]
  %v85 = vld [vmem:[%s3] sm:$0x7]
  %v87 = vperm.slane %v85, 0
  %v88 = vperm.slane %v85, 1
  %v89 = vperm.slane %v85, 2
  %93 = vmatpush.msra.mxu0 %v82
  %94 = vmatpush.msra.mxu0 %v79
  %95 = vmatpush.msra.mxu0 %v76
  %96 = vmatpush.msra.mxu0 %v73
  %97 = vmatpush.msra.mxu0 %v70
  %98 = vmatpush.msra.mxu0 %v67
  %99 = vmatpush.msra.mxu0 %v64
  %100 = vmatpush.msra.mxu0 %v61
  %101 = vmatpush.msra.mxu0 %v58
  %102 = vmatpush.msra.mxu0 %v55
  %103 = vmatpush.msra.mxu0 %v52
  %104 = vmatpush.msra.mxu0 %v49
  %105 = vmatpush.msra.mxu0 %v46
  %106 = vmatpush.msra.mxu0 %v43
  %107 = vmatpush.msra.mxu0 %v40
  %108 = vmatpush.msra.mxu0 %v37
  %109 = vmatmul.f32.gmra.mxu0 %v29
  %v110 = vpop.f32.mrf.mxu0
  %v111 = vadd.f32 %v87, %v110
  %112 = vmatmul.f32.gmra.mxu0 %v30
  %v113 = vpop.f32.mrf.mxu0
  %v114 = vadd.f32 %v87, %v113
  %115 = vmatmul.f32.gmra.mxu0 %v31
  %v116 = vpop.f32.mrf.mxu0
  %v117 = vadd.f32 %v87, %v116
  %118 = vmatmul.f32.gmra.mxu0 %v32
  %v119 = vpop.f32.mrf.mxu0
  %v120 = vadd.f32 %v87, %v119
  %121 = vmatmul.f32.gmra.mxu0 %v33
  %v122 = vpop.f32.mrf.mxu0
  %v123 = vadd.f32 %v87, %v122
  %124 = vmatmul.f32.gmra.mxu0 %v34
  %v125 = vpop.f32.mrf.mxu0
  %v126 = vadd.f32 %v87, %v125
  %127 = vmatmul.f32.gmra.mxu0 %v35
  %v128 = vpop.f32.mrf.mxu0
  %v129 = vadd.f32 %v87, %v128
  %130 = vmatmul.f32.gmra.mxu0 %v36
  %v131 = vpop.f32.mrf.mxu0
  %v132 = vadd.f32 %v87, %v131
  %133 = vdwg.mxu0
  %134 = vmatpush.msra.mxu0 %v83
  %135 = vmatpush.msra.mxu0 %v80
  %136 = vmatpush.msra.mxu0 %v77
  %137 = vmatpush.msra.mxu0 %v74
  %138 = vmatpush.msra.mxu0 %v71
  %139 = vmatpush.msra.mxu0 %v68
  %140 = vmatpush.msra.mxu0 %v65
  %141 = vmatpush.msra.mxu0 %v62
  %142 = vmatpush.msra.mxu0 %v59
  %143 = vmatpush.msra.mxu0 %v56
  %144 = vmatpush.msra.mxu0 %v53
  %145 = vmatpush.msra.mxu0 %v50
  %146 = vmatpush.msra.mxu0 %v47
  %147 = vmatpush.msra.mxu0 %v44
  %148 = vmatpush.msra.mxu0 %v41
  %149 = vmatpush.msra.mxu0 %v38
  %150 = vmatmul.f32.gmra.mxu0 %v29
  %v151 = vpop.f32.mrf.mxu0
  %v152 = vadd.f32 %v88, %v151
  %153 = vmatmul.f32.gmra.mxu0 %v30
  %v154 = vpop.f32.mrf.mxu0
  %v155 = vadd.f32 %v88, %v154
  %156 = vmatmul.f32.gmra.mxu0 %v31
  %v157 = vpop.f32.mrf.mxu0
  %v158 = vadd.f32 %v88, %v157
  %159 = vmatmul.f32.gmra.mxu0 %v32
  %v160 = vpop.f32.mrf.mxu0
  %v161 = vadd.f32 %v88, %v160
  %162 = vmatmul.f32.gmra.mxu0 %v33
  %v163 = vpop.f32.mrf.mxu0
  %v164 = vadd.f32 %v88, %v163
  %165 = vmatmul.f32.gmra.mxu0 %v34
  %v166 = vpop.f32.mrf.mxu0
  %v167 = vadd.f32 %v88, %v166
  %168 = vmatmul.f32.gmra.mxu0 %v35
  %v169 = vpop.f32.mrf.mxu0
  %v170 = vadd.f32 %v88, %v169
  %171 = vmatmul.f32.gmra.mxu0 %v36
  %v172 = vpop.f32.mrf.mxu0
  %v173 = vadd.f32 %v88, %v172
  %174 = vdwg.mxu0
  %175 = vmatpush.msra.mxu0 %v84
  %176 = vmatpush.msra.mxu0 %v81
  %177 = vmatpush.msra.mxu0 %v78
  %178 = vmatpush.msra.mxu0 %v75
  %179 = vmatpush.msra.mxu0 %v72
  %180 = vmatpush.msra.mxu0 %v69
  %181 = vmatpush.msra.mxu0 %v66
  %182 = vmatpush.msra.mxu0 %v63
  %183 = vmatpush.msra.mxu0 %v60
  %184 = vmatpush.msra.mxu0 %v57
  %185 = vmatpush.msra.mxu0 %v54
  %186 = vmatpush.msra.mxu0 %v51
  %187 = vmatpush.msra.mxu0 %v48
  %188 = vmatpush.msra.mxu0 %v45
  %189 = vmatpush.msra.mxu0 %v42
  %190 = vmatpush.msra.mxu0 %v39
  %191 = vmatmul.f32.gmra.mxu0 %v29
  %v192 = vpop.f32.mrf.mxu0
  %v193 = vadd.f32 %v89, %v192
  %194 = vmatmul.f32.gmra.mxu0 %v30
  %v195 = vpop.f32.mrf.mxu0
  %v196 = vadd.f32 %v89, %v195
  %197 = vmatmul.f32.gmra.mxu0 %v31
  %v198 = vpop.f32.mrf.mxu0
  %v199 = vadd.f32 %v89, %v198
  %200 = vmatmul.f32.gmra.mxu0 %v32
  %v201 = vpop.f32.mrf.mxu0
  %v202 = vadd.f32 %v89, %v201
  %203 = vmatmul.f32.gmra.mxu0 %v33
  %v204 = vpop.f32.mrf.mxu0
  %v205 = vadd.f32 %v89, %v204
  %206 = vmatmul.f32.gmra.mxu0 %v34
  %v207 = vpop.f32.mrf.mxu0
  %v208 = vadd.f32 %v89, %v207
  %209 = vmatmul.f32.gmra.mxu0 %v35
  %v210 = vpop.f32.mrf.mxu0
  %v211 = vadd.f32 %v89, %v210
  %212 = vmatmul.f32.gmra.mxu0 %v36
  %v213 = vpop.f32.mrf.mxu0
  %v214 = vadd.f32 %v89, %v213
  %215 = vdwg.mxu0
  %216 = vst [vmem:[#allocation2] sm:$0xff] %v111
  %217 = vst [vmem:[#allocation2 + $0x8] sm:$0xff] %v152
  %218 = vst [vmem:[#allocation2 + $0x10] sm:$0xff] %v193
  %219 = vst [vmem:[#allocation2 + $0x18] sm:$0xff] %v114
  %220 = vst [vmem:[#allocation2 + $0x20] sm:$0xff] %v155
  %221 = vst [vmem:[#allocation2 + $0x28] sm:$0xff] %v196
  %222 = vst [vmem:[#allocation2 + $0x30] sm:$0xff] %v117
  %223 = vst [vmem:[#allocation2 + $0x38] sm:$0xff] %v158
  %224 = vst [vmem:[#allocation2 + $0x40] sm:$0xff] %v199
  %225 = vst [vmem:[#allocation2 + $0x48] sm:$0xff] %v120
  %226 = vst [vmem:[#allocation2 + $0x50] sm:$0xff] %v161
  %227 = vst [vmem:[#allocation2 + $0x58] sm:$0xff] %v202
  %228 = vst [vmem:[#allocation2 + $0x60] sm:$0xff] %v123
  %229 = vst [vmem:[#allocation2 + $0x68] sm:$0xff] %v164
  %230 = vst [vmem:[#allocation2 + $0x70] sm:$0xff] %v205
  %231 = vst [vmem:[#allocation2 + $0x78] sm:$0xff] %v126
  %232 = vst [vmem:[#allocation2 + $0x80] sm:$0xff] %v167
  %233 = vst [vmem:[#allocation2 + $0x88] sm:$0xff] %v208
  %234 = vst [vmem:[#allocation2 + $0x90] sm:$0xff] %v129
  %235 = vst [vmem:[#allocation2 + $0x98] sm:$0xff] %v170
  %236 = vst [vmem:[#allocation2 + $0xa0] sm:$0xff] %v211
  %237 = vst [vmem:[#allocation2 + $0xa8] sm:$0xff] %v132
  %238 = vst [vmem:[#allocation2 + $0xb0] sm:$0xff] %v173
  %239 = vst [vmem:[#allocation2 + $0xb8] sm:$0xff] %v214
  %v240 = vld [vmem:[%s4] sm:$0x7]
  %v242 = vperm.slane %v240, 0
  %v243 = vperm.slane %v240, 1
  %v244 = vperm.slane %v240, 2
  %v248 = vld [vmem:[%s5] sm:$0x1]
  %v250 = vperm.slane %v248, 0
  %v252 = vlaneseq
  %v253 = vand.u32 %v252, 127
  %s254 = smul.u32 0, 3
  %s255 = smul.addr %s254, 8
  %s256 = scalar_lea.vmem [#allocation2], %s255
  %v257 = vld [vmem:[%s256] sm:$0xff]
  %v258 = vld [vmem:[%s256 + $0x8] sm:$0xff]
  %v259 = vld [vmem:[%s256 + $0x10] sm:$0xff]
  %v260 = vld [vmem:[%s2] sm:$0xff]
  %v261 = vld [vmem:[%s2 + $0x8] sm:$0xf]
  %v262 = vld [vmem:[%s2 + $0xc] sm:$0xff]
  %v263 = vld [vmem:[%s2 + $0x14] sm:$0xf]
  %v264 = vld [vmem:[%s2 + $0x18] sm:$0xff]
  %v265 = vld [vmem:[%s2 + $0x20] sm:$0xf]
  %v266 = vld [vmem:[%s2 + $0x24] sm:$0xff]
  %v267 = vld [vmem:[%s2 + $0x2c] sm:$0xf]
  %v268 = vld [vmem:[%s2 + $0x30] sm:$0xff]
  %v269 = vld [vmem:[%s2 + $0x38] sm:$0xf]
  %v270 = vld [vmem:[%s2 + $0x3c] sm:$0xff]
  %v271 = vld [vmem:[%s2 + $0x44] sm:$0xf]
  %v272 = vld [vmem:[%s2 + $0x48] sm:$0xff]
  %v273 = vld [vmem:[%s2 + $0x50] sm:$0xf]
  %v274 = vld [vmem:[%s2 + $0x54] sm:$0xff]
  %v275 = vld [vmem:[%s2 + $0x5c] sm:$0xf]
  %v276 = vld [vmem:[%s2 + $0x60] sm:$0xff]
  %v277 = vld [vmem:[%s2 + $0x68] sm:$0xf]
  %v278 = vld [vmem:[%s2 + $0x6c] sm:$0xff]
  %v279 = vld [vmem:[%s2 + $0x74] sm:$0xf]
  %v280 = vld [vmem:[%s2 + $0x78] sm:$0xff]
  %v281 = vld [vmem:[%s2 + $0x80] sm:$0xf]
  %v282 = vld [vmem:[%s2 + $0x84] sm:$0xff]
  %v283 = vld [vmem:[%s2 + $0x8c] sm:$0xf]
  %v284 = vld [vmem:[%s2 + $0x90] sm:$0xff]
  %v285 = vld [vmem:[%s2 + $0x98] sm:$0xf]
  %v286 = vld [vmem:[%s2 + $0x9c] sm:$0xff]
  %v287 = vld [vmem:[%s2 + $0xa4] sm:$0xf]
  %v288 = vld [vmem:[%s2 + $0xa8] sm:$0xff]
  %v289 = vld [vmem:[%s2 + $0xb0] sm:$0xf]
  %v290 = vld [vmem:[%s2 + $0xb4] sm:$0xff]
  %v291 = vld [vmem:[%s2 + $0xbc] sm:$0xf]
  %v324 = vunpack.c.l.b16 %v260
  %v325 = vunpack.c.h.b16 %v260
  %v326 = vunpack.c.l.b16 %v261
  %v327 = vunpack.c.l.b16 %v262
  %v328 = vunpack.c.h.b16 %v262
  %v329 = vunpack.c.l.b16 %v263
  %v330 = vunpack.c.l.b16 %v264
  %v331 = vunpack.c.h.b16 %v264
  %v332 = vunpack.c.l.b16 %v265
  %v333 = vunpack.c.l.b16 %v266
  %v334 = vunpack.c.h.b16 %v266
  %v335 = vunpack.c.l.b16 %v267
  %v336 = vunpack.c.l.b16 %v268
  %v337 = vunpack.c.h.b16 %v268
  %v338 = vunpack.c.l.b16 %v269
  %v339 = vunpack.c.l.b16 %v270
  %v340 = vunpack.c.h.b16 %v270
  %v341 = vunpack.c.l.b16 %v271
  %v342 = vunpack.c.l.b16 %v272
  %v343 = vunpack.c.h.b16 %v272
  %v344 = vunpack.c.l.b16 %v273
  %v345 = vunpack.c.l.b16 %v274
  %v346 = vunpack.c.h.b16 %v274
  %v347 = vunpack.c.l.b16 %v275
  %v348 = vunpack.c.l.b16 %v276
  %v349 = vunpack.c.h.b16 %v276
  %v350 = vunpack.c.l.b16 %v277
  %v351 = vunpack.c.l.b16 %v278
  %v352 = vunpack.c.h.b16 %v278
  %v353 = vunpack.c.l.b16 %v279
  %v354 = vunpack.c.l.b16 %v280
  %v355 = vunpack.c.h.b16 %v280
  %v356 = vunpack.c.l.b16 %v281
  %v357 = vunpack.c.l.b16 %v282
  %v358 = vunpack.c.h.b16 %v282
  %v359 = vunpack.c.l.b16 %v283
  %v360 = vunpack.c.l.b16 %v284
  %v361 = vunpack.c.h.b16 %v284
  %v362 = vunpack.c.l.b16 %v285
  %v363 = vunpack.c.l.b16 %v286
  %v364 = vunpack.c.h.b16 %v286
  %v365 = vunpack.c.l.b16 %v287
  %v366 = vunpack.c.l.b16 %v288
  %v367 = vunpack.c.h.b16 %v288
  %v368 = vunpack.c.l.b16 %v289
  %v369 = vunpack.c.l.b16 %v290
  %v370 = vunpack.c.h.b16 %v290
  %v371 = vunpack.c.l.b16 %v291
  %v372 = vpack.c.b16 %v327, %v324
  %v373 = vpack.c.b16 %v328, %v325
  %v374 = vpack.c.b16 %v329, %v326
  %v375 = vpack.c.b16 %v333, %v330
  %v376 = vpack.c.b16 %v334, %v331
  %v377 = vpack.c.b16 %v335, %v332
  %v378 = vpack.c.b16 %v339, %v336
  %v379 = vpack.c.b16 %v340, %v337
  %v380 = vpack.c.b16 %v341, %v338
  %v381 = vpack.c.b16 %v345, %v342
  %v382 = vpack.c.b16 %v346, %v343
  %v383 = vpack.c.b16 %v347, %v344
  %v384 = vpack.c.b16 %v351, %v348
  %v385 = vpack.c.b16 %v352, %v349
  %v386 = vpack.c.b16 %v353, %v350
  %v387 = vpack.c.b16 %v357, %v354
  %v388 = vpack.c.b16 %v358, %v355
  %v389 = vpack.c.b16 %v359, %v356
  %v390 = vpack.c.b16 %v363, %v360
  %v391 = vpack.c.b16 %v364, %v361
  %v392 = vpack.c.b16 %v365, %v362
  %v393 = vpack.c.b16 %v369, %v366
  %v394 = vpack.c.b16 %v370, %v367
  %v395 = vpack.c.b16 %v371, %v368
  %420 = vmatpush.bf16.msra.mxu0 %v393
  %421 = vmatpush.bf16.msra.mxu0 %v390
  %422 = vmatpush.bf16.msra.mxu0 %v387
  %423 = vmatpush.bf16.msra.mxu0 %v384
  %424 = vmatpush.bf16.msra.mxu0 %v381
  %425 = vmatpush.bf16.msra.mxu0 %v378
  %426 = vmatpush.bf16.msra.mxu0 %v375
  %427 = vmatpush.bf16.msra.mxu0 %v372
  %428 = vmatmul.bf16.gmra.mxu0 0
  %v429 = vpop.f32.mrf.mxu0
  %v430 = vadd.f32 %v242, %v429
  %v431 = vpop.f32.mrf.mxu0
  %432 = vdwg.mxu0
  %433 = vmatpush.bf16.msra.mxu0 %v394
  %434 = vmatpush.bf16.msra.mxu0 %v391
  %435 = vmatpush.bf16.msra.mxu0 %v388
  %436 = vmatpush.bf16.msra.mxu0 %v385
  %437 = vmatpush.bf16.msra.mxu0 %v382
  %438 = vmatpush.bf16.msra.mxu0 %v379
  %439 = vmatpush.bf16.msra.mxu0 %v376
  %440 = vmatpush.bf16.msra.mxu0 %v373
  %441 = vmatmul.bf16.gmra.mxu0 0
  %v442 = vpop.f32.mrf.mxu0
  %v443 = vadd.f32 %v243, %v442
  %v444 = vpop.f32.mrf.mxu0
  %445 = vdwg.mxu0
  %446 = vmatpush.bf16.msra.mxu0 %v395
  %447 = vmatpush.bf16.msra.mxu0 %v392
  %448 = vmatpush.bf16.msra.mxu0 %v389
  %449 = vmatpush.bf16.msra.mxu0 %v386
  %450 = vmatpush.bf16.msra.mxu0 %v383
  %451 = vmatpush.bf16.msra.mxu0 %v380
  %452 = vmatpush.bf16.msra.mxu0 %v377
  %453 = vmatpush.bf16.msra.mxu0 %v374
  %454 = vmatmul.bf16.gmra.mxu0 0
  %v455 = vpop.f32.mrf.mxu0
  %v456 = vadd.f32 %v244, %v455
  %v457 = vpop.f32.mrf.mxu0
  %458 = vdwg.mxu0
  %v459 = vadd.f32 %v257, %v430
  %v460 = vxor.u32 %v459, 2147483648
  %v461 = vmul.f32 %v460, 1.442695
  %v462 = vpow.pop %v461
  %v463 = vadd.f32 %v462, 1.0
  %v464 = vrcp.pop %v463
  %v465 = vmul.f32 %v463, %v464
  %v466 = vsub.f32 1.0, %v465
  %v467 = vmul.f32 %v464, %v466
  %v468 = vadd.f32 %v464, %v467
  %vm469 = vweird.f32 %v463
  %vm470 = vweird.f32 %v464
  %vm471 = vmor %vm469, %vm470
  %v472 = vsel %vm471, %v464, %v468
  %v473 = vand.u32 2147483647, %v463
  %vm474 = vcmp.eq.f32.partialorder %v473, 8.507059e+37
  %v475 = vand.u32 %v463, 2147483648
  %v476 = vor.u32 1.1754944e-38, %v475
  %v477 = vsel %vm474, %v476, %v472
  %v478 = vmul.f32 1.0, %v477
  %v479 = vadd.f32 %v258, %v443
  %v480 = vxor.u32 %v479, 2147483648
  %v481 = vmul.f32 %v480, 1.442695
  %v482 = vpow.pop %v481
  %v483 = vadd.f32 %v482, 1.0
  %v484 = vrcp.pop %v483
  %v485 = vmul.f32 %v483, %v484
  %v486 = vsub.f32 1.0, %v485
  %v487 = vmul.f32 %v484, %v486
  %v488 = vadd.f32 %v484, %v487
  %vm489 = vweird.f32 %v483
  %vm490 = vweird.f32 %v484
  %vm491 = vmor %vm489, %vm490
  %v492 = vsel %vm491, %v484, %v488
  %v493 = vand.u32 2147483647, %v483
  %vm494 = vcmp.eq.f32.partialorder %v493, 8.507059e+37
  %v495 = vand.u32 %v483, 2147483648
  %v496 = vor.u32 1.1754944e-38, %v495
  %v497 = vsel %vm494, %v496, %v492
  %v498 = vmul.f32 1.0, %v497
  %v499 = vmul.f32 %v478, %v456
  %v500 = vadd.f32 %v259, %v499
  %v501 = vtanh.pop %v500
  %v502 = vsub.f32 1.0, %v498
  %v503 = vmul.f32 %v502, %v501
  %v504 = vmul.f32 %v498, 0.0
  %v505 = vadd.f32 %v503, %v504
  %v506 = vmul.f32 %v505, %v250
  %507 = vadd.xlane.f32.xlu0 %v506
  %v508 = vpop.xlane.xlu0 %507
  %vm509 = vcmp.eq.s32.totalorder %v253, 0
  %v510 = vsel %vm509, %v508, 0.0
  %s511 = smul.u32 1, 3
  %s512 = smul.addr %s511, 8
  %s513 = scalar_lea.vmem [#allocation2], %s512
  %v514 = vld [vmem:[%s513] sm:$0xff]
  %v515 = vld [vmem:[%s513 + $0x8] sm:$0xff]
  %v516 = vld [vmem:[%s513 + $0x10] sm:$0xff]
  %v517 = vpack.c.bf16 %v505, %v505
  %518 = vmatpush.bf16.msra.mxu0 %v393
  %519 = vmatpush.bf16.msra.mxu0 %v390
  %520 = vmatpush.bf16.msra.mxu0 %v387
  %521 = vmatpush.bf16.msra.mxu0 %v384
  %522 = vmatpush.bf16.msra.mxu0 %v381
  %523 = vmatpush.bf16.msra.mxu0 %v378
  %524 = vmatpush.bf16.msra.mxu0 %v375
  %525 = vmatpush.bf16.msra.mxu0 %v372
  %526 = vmatmul.bf16.gmra.mxu0 %v517
  %v527 = vpop.f32.mrf.mxu0
  %v528 = vadd.f32 %v242, %v527
  %v529 = vpop.f32.mrf.mxu0
  %530 = vdwg.mxu0
  %531 = vmatpush.bf16.msra.mxu0 %v394
  %532 = vmatpush.bf16.msra.mxu0 %v391
  %533 = vmatpush.bf16.msra.mxu0 %v388
  %534 = vmatpush.bf16.msra.mxu0 %v385
  %535 = vmatpush.bf16.msra.mxu0 %v382
  %536 = vmatpush.bf16.msra.mxu0 %v379
  %537 = vmatpush.bf16.msra.mxu0 %v376
  %538 = vmatpush.bf16.msra.mxu0 %v373
  %539 = vmatmul.bf16.gmra.mxu0 %v517
  %v540 = vpop.f32.mrf.mxu0
  %v541 = vadd.f32 %v243, %v540
  %v542 = vpop.f32.mrf.mxu0
  %543 = vdwg.mxu0
  %544 = vmatpush.bf16.msra.mxu0 %v395
  %545 = vmatpush.bf16.msra.mxu0 %v392
  %546 = vmatpush.bf16.msra.mxu0 %v389
  %547 = vmatpush.bf16.msra.mxu0 %v386
  %548 = vmatpush.bf16.msra.mxu0 %v383
  %549 = vmatpush.bf16.msra.mxu0 %v380
  %550 = vmatpush.bf16.msra.mxu0 %v377
  %551 = vmatpush.bf16.msra.mxu0 %v374
  %552 = vmatmul.bf16.gmra.mxu0 %v517
  %v553 = vpop.f32.mrf.mxu0
  %v554 = vadd.f32 %v244, %v553
  %v555 = vpop.f32.mrf.mxu0
  %556 = vdwg.mxu0
  %v557 = vadd.f32 %v514, %v528
  %v558 = vxor.u32 %v557, 2147483648
  %v559 = vmul.f32 %v558, 1.442695
  %v560 = vpow.pop %v559
  %v561 = vadd.f32 %v560, 1.0
  %v562 = vrcp.pop %v561
  %v563 = vmul.f32 %v561, %v562
  %v564 = vsub.f32 1.0, %v563
  %v565 = vmul.f32 %v562, %v564
  %v566 = vadd.f32 %v562, %v565
  %vm567 = vweird.f32 %v561
  %vm568 = vweird.f32 %v562
  %vm569 = vmor %vm567, %vm568
  %v570 = vsel %vm569, %v562, %v566
  %v571 = vand.u32 2147483647, %v561
  %vm572 = vcmp.eq.f32.partialorder %v571, 8.507059e+37
  %v573 = vand.u32 %v561, 2147483648
  %v574 = vor.u32 1.1754944e-38, %v573
  %v575 = vsel %vm572, %v574, %v570
  %v576 = vmul.f32 1.0, %v575
  %v577 = vadd.f32 %v515, %v541
  %v578 = vxor.u32 %v577, 2147483648
  %v579 = vmul.f32 %v578, 1.442695
  %v580 = vpow.pop %v579
  %v581 = vadd.f32 %v580, 1.0
  %v582 = vrcp.pop %v581
  %v583 = vmul.f32 %v581, %v582
  %v584 = vsub.f32 1.0, %v583
  %v585 = vmul.f32 %v582, %v584
  %v586 = vadd.f32 %v582, %v585
  %vm587 = vweird.f32 %v581
  %vm588 = vweird.f32 %v582
  %vm589 = vmor %vm587, %vm588
  %v590 = vsel %vm589, %v582, %v586
  %v591 = vand.u32 2147483647, %v581
  %vm592 = vcmp.eq.f32.partialorder %v591, 8.507059e+37
  %v593 = vand.u32 %v581, 2147483648
  %v594 = vor.u32 1.1754944e-38, %v593
  %v595 = vsel %vm592, %v594, %v590
  %v596 = vmul.f32 1.0, %v595
  %v597 = vmul.f32 %v576, %v554
  %v598 = vadd.f32 %v516, %v597
  %v599 = vtanh.pop %v598
  %v600 = vsub.f32 1.0, %v596
  %v601 = vmul.f32 %v600, %v599
  %v602 = vmul.f32 %v596, %v505
  %v603 = vadd.f32 %v601, %v602
  %v604 = vmul.f32 %v603, %v250
  %605 = vadd.xlane.f32.xlu0 %v604
  %v606 = vpop.xlane.xlu0 %605
  %vm607 = vcmp.eq.s32.totalorder %v253, 1
  %v608 = vsel %vm607, %v606, %v510
  %s609 = smul.u32 2, 3
  %s610 = smul.addr %s609, 8
  %s611 = scalar_lea.vmem [#allocation2], %s610
  %v612 = vld [vmem:[%s611] sm:$0xff]
  %v613 = vld [vmem:[%s611 + $0x8] sm:$0xff]
  %v614 = vld [vmem:[%s611 + $0x10] sm:$0xff]
  %v615 = vpack.c.bf16 %v603, %v603
  %616 = vmatpush.bf16.msra.mxu0 %v393
  %617 = vmatpush.bf16.msra.mxu0 %v390
  %618 = vmatpush.bf16.msra.mxu0 %v387
  %619 = vmatpush.bf16.msra.mxu0 %v384
  %620 = vmatpush.bf16.msra.mxu0 %v381
  %621 = vmatpush.bf16.msra.mxu0 %v378
  %622 = vmatpush.bf16.msra.mxu0 %v375
  %623 = vmatpush.bf16.msra.mxu0 %v372
  %624 = vmatmul.bf16.gmra.mxu0 %v615
  %v625 = vpop.f32.mrf.mxu0
  %v626 = vadd.f32 %v242, %v625
  %v627 = vpop.f32.mrf.mxu0
  %628 = vdwg.mxu0
  %629 = vmatpush.bf16.msra.mxu0 %v394
  %630 = vmatpush.bf16.msra.mxu0 %v391
  %631 = vmatpush.bf16.msra.mxu0 %v388
  %632 = vmatpush.bf16.msra.mxu0 %v385
  %633 = vmatpush.bf16.msra.mxu0 %v382
  %634 = vmatpush.bf16.msra.mxu0 %v379
  %635 = vmatpush.bf16.msra.mxu0 %v376
  %636 = vmatpush.bf16.msra.mxu0 %v373
  %637 = vmatmul.bf16.gmra.mxu0 %v615
  %v638 = vpop.f32.mrf.mxu0
  %v639 = vadd.f32 %v243, %v638
  %v640 = vpop.f32.mrf.mxu0
  %641 = vdwg.mxu0
  %642 = vmatpush.bf16.msra.mxu0 %v395
  %643 = vmatpush.bf16.msra.mxu0 %v392
  %644 = vmatpush.bf16.msra.mxu0 %v389
  %645 = vmatpush.bf16.msra.mxu0 %v386
  %646 = vmatpush.bf16.msra.mxu0 %v383
  %647 = vmatpush.bf16.msra.mxu0 %v380
  %648 = vmatpush.bf16.msra.mxu0 %v377
  %649 = vmatpush.bf16.msra.mxu0 %v374
  %650 = vmatmul.bf16.gmra.mxu0 %v615
  %v651 = vpop.f32.mrf.mxu0
  %v652 = vadd.f32 %v244, %v651
  %v653 = vpop.f32.mrf.mxu0
  %654 = vdwg.mxu0
  %v655 = vadd.f32 %v612, %v626
  %v656 = vxor.u32 %v655, 2147483648
  %v657 = vmul.f32 %v656, 1.442695
  %v658 = vpow.pop %v657
  %v659 = vadd.f32 %v658, 1.0
  %v660 = vrcp.pop %v659
  %v661 = vmul.f32 %v659, %v660
  %v662 = vsub.f32 1.0, %v661
  %v663 = vmul.f32 %v660, %v662
  %v664 = vadd.f32 %v660, %v663
  %vm665 = vweird.f32 %v659
  %vm666 = vweird.f32 %v660
  %vm667 = vmor %vm665, %vm666
  %v668 = vsel %vm667, %v660, %v664
  %v669 = vand.u32 2147483647, %v659
  %vm670 = vcmp.eq.f32.partialorder %v669, 8.507059e+37
  %v671 = vand.u32 %v659, 2147483648
  %v672 = vor.u32 1.1754944e-38, %v671
  %v673 = vsel %vm670, %v672, %v668
  %v674 = vmul.f32 1.0, %v673
  %v675 = vadd.f32 %v613, %v639
  %v676 = vxor.u32 %v675, 2147483648
  %v677 = vmul.f32 %v676, 1.442695
  %v678 = vpow.pop %v677
  %v679 = vadd.f32 %v678, 1.0
  %v680 = vrcp.pop %v679
  %v681 = vmul.f32 %v679, %v680
  %v682 = vsub.f32 1.0, %v681
  %v683 = vmul.f32 %v680, %v682
  %v684 = vadd.f32 %v680, %v683
  %vm685 = vweird.f32 %v679
  %vm686 = vweird.f32 %v680
  %vm687 = vmor %vm685, %vm686
  %v688 = vsel %vm687, %v680, %v684
  %v689 = vand.u32 2147483647, %v679
  %vm690 = vcmp.eq.f32.partialorder %v689, 8.507059e+37
  %v691 = vand.u32 %v679, 2147483648
  %v692 = vor.u32 1.1754944e-38, %v691
  %v693 = vsel %vm690, %v692, %v688
  %v694 = vmul.f32 1.0, %v693
  %v695 = vmul.f32 %v674, %v652
  %v696 = vadd.f32 %v614, %v695
  %v697 = vtanh.pop %v696
  %v698 = vsub.f32 1.0, %v694
  %v699 = vmul.f32 %v698, %v697
  %v700 = vmul.f32 %v694, %v603
  %v701 = vadd.f32 %v699, %v700
  %v702 = vmul.f32 %v701, %v250
  %703 = vadd.xlane.f32.xlu0 %v702
  %v704 = vpop.xlane.xlu0 %703
  %vm705 = vcmp.eq.s32.totalorder %v253, 2
  %v706 = vsel %vm705, %v704, %v608
  %s707 = smul.u32 3, 3
  %s708 = smul.addr %s707, 8
  %s709 = scalar_lea.vmem [#allocation2], %s708
  %v710 = vld [vmem:[%s709] sm:$0xff]
  %v711 = vld [vmem:[%s709 + $0x8] sm:$0xff]
  %v712 = vld [vmem:[%s709 + $0x10] sm:$0xff]
  %v713 = vpack.c.bf16 %v701, %v701
  %714 = vmatpush.bf16.msra.mxu0 %v393
  %715 = vmatpush.bf16.msra.mxu0 %v390
  %716 = vmatpush.bf16.msra.mxu0 %v387
  %717 = vmatpush.bf16.msra.mxu0 %v384
  %718 = vmatpush.bf16.msra.mxu0 %v381
  %719 = vmatpush.bf16.msra.mxu0 %v378
  %720 = vmatpush.bf16.msra.mxu0 %v375
  %721 = vmatpush.bf16.msra.mxu0 %v372
  %722 = vmatmul.bf16.gmra.mxu0 %v713
  %v723 = vpop.f32.mrf.mxu0
  %v724 = vadd.f32 %v242, %v723
  %v725 = vpop.f32.mrf.mxu0
  %726 = vdwg.mxu0
  %727 = vmatpush.bf16.msra.mxu0 %v394
  %728 = vmatpush.bf16.msra.mxu0 %v391
  %729 = vmatpush.bf16.msra.mxu0 %v388
  %730 = vmatpush.bf16.msra.mxu0 %v385
  %731 = vmatpush.bf16.msra.mxu0 %v382
  %732 = vmatpush.bf16.msra.mxu0 %v379
  %733 = vmatpush.bf16.msra.mxu0 %v376
  %734 = vmatpush.bf16.msra.mxu0 %v373
  %735 = vmatmul.bf16.gmra.mxu0 %v713
  %v736 = vpop.f32.mrf.mxu0
  %v737 = vadd.f32 %v243, %v736
  %v738 = vpop.f32.mrf.mxu0
  %739 = vdwg.mxu0
  %740 = vmatpush.bf16.msra.mxu0 %v395
  %741 = vmatpush.bf16.msra.mxu0 %v392
  %742 = vmatpush.bf16.msra.mxu0 %v389
  %743 = vmatpush.bf16.msra.mxu0 %v386
  %744 = vmatpush.bf16.msra.mxu0 %v383
  %745 = vmatpush.bf16.msra.mxu0 %v380
  %746 = vmatpush.bf16.msra.mxu0 %v377
  %747 = vmatpush.bf16.msra.mxu0 %v374
  %748 = vmatmul.bf16.gmra.mxu0 %v713
  %v749 = vpop.f32.mrf.mxu0
  %v750 = vadd.f32 %v244, %v749
  %v751 = vpop.f32.mrf.mxu0
  %752 = vdwg.mxu0
  %v753 = vadd.f32 %v710, %v724
  %v754 = vxor.u32 %v753, 2147483648
  %v755 = vmul.f32 %v754, 1.442695
  %v756 = vpow.pop %v755
  %v757 = vadd.f32 %v756, 1.0
  %v758 = vrcp.pop %v757
  %v759 = vmul.f32 %v757, %v758
  %v760 = vsub.f32 1.0, %v759
  %v761 = vmul.f32 %v758, %v760
  %v762 = vadd.f32 %v758, %v761
  %vm763 = vweird.f32 %v757
  %vm764 = vweird.f32 %v758
  %vm765 = vmor %vm763, %vm764
  %v766 = vsel %vm765, %v758, %v762
  %v767 = vand.u32 2147483647, %v757
  %vm768 = vcmp.eq.f32.partialorder %v767, 8.507059e+37
  %v769 = vand.u32 %v757, 2147483648
  %v770 = vor.u32 1.1754944e-38, %v769
  %v771 = vsel %vm768, %v770, %v766
  %v772 = vmul.f32 1.0, %v771
  %v773 = vadd.f32 %v711, %v737
  %v774 = vxor.u32 %v773, 2147483648
  %v775 = vmul.f32 %v774, 1.442695
  %v776 = vpow.pop %v775
  %v777 = vadd.f32 %v776, 1.0
  %v778 = vrcp.pop %v777
  %v779 = vmul.f32 %v777, %v778
  %v780 = vsub.f32 1.0, %v779
  %v781 = vmul.f32 %v778, %v780
  %v782 = vadd.f32 %v778, %v781
  %vm783 = vweird.f32 %v777
  %vm784 = vweird.f32 %v778
  %vm785 = vmor %vm783, %vm784
  %v786 = vsel %vm785, %v778, %v782
  %v787 = vand.u32 2147483647, %v777
  %vm788 = vcmp.eq.f32.partialorder %v787, 8.507059e+37
  %v789 = vand.u32 %v777, 2147483648
  %v790 = vor.u32 1.1754944e-38, %v789
  %v791 = vsel %vm788, %v790, %v786
  %v792 = vmul.f32 1.0, %v791
  %v793 = vmul.f32 %v772, %v750
  %v794 = vadd.f32 %v712, %v793
  %v795 = vtanh.pop %v794
  %v796 = vsub.f32 1.0, %v792
  %v797 = vmul.f32 %v796, %v795
  %v798 = vmul.f32 %v792, %v701
  %v799 = vadd.f32 %v797, %v798
  %v800 = vmul.f32 %v799, %v250
  %801 = vadd.xlane.f32.xlu0 %v800
  %v802 = vpop.xlane.xlu0 %801
  %vm803 = vcmp.eq.s32.totalorder %v253, 3
  %v804 = vsel %vm803, %v802, %v706
  %s805 = smul.u32 4, 3
  %s806 = smul.addr %s805, 8
  %s807 = scalar_lea.vmem [#allocation2], %s806
  %v808 = vld [vmem:[%s807] sm:$0xff]
  %v809 = vld [vmem:[%s807 + $0x8] sm:$0xff]
  %v810 = vld [vmem:[%s807 + $0x10] sm:$0xff]
  %v811 = vpack.c.bf16 %v799, %v799
  %812 = vmatpush.bf16.msra.mxu0 %v393
  %813 = vmatpush.bf16.msra.mxu0 %v390
  %814 = vmatpush.bf16.msra.mxu0 %v387
  %815 = vmatpush.bf16.msra.mxu0 %v384
  %816 = vmatpush.bf16.msra.mxu0 %v381
  %817 = vmatpush.bf16.msra.mxu0 %v378
  %818 = vmatpush.bf16.msra.mxu0 %v375
  %819 = vmatpush.bf16.msra.mxu0 %v372
  %820 = vmatmul.bf16.gmra.mxu0 %v811
  %v821 = vpop.f32.mrf.mxu0
  %v822 = vadd.f32 %v242, %v821
  %v823 = vpop.f32.mrf.mxu0
  %824 = vdwg.mxu0
  %825 = vmatpush.bf16.msra.mxu0 %v394
  %826 = vmatpush.bf16.msra.mxu0 %v391
  %827 = vmatpush.bf16.msra.mxu0 %v388
  %828 = vmatpush.bf16.msra.mxu0 %v385
  %829 = vmatpush.bf16.msra.mxu0 %v382
  %830 = vmatpush.bf16.msra.mxu0 %v379
  %831 = vmatpush.bf16.msra.mxu0 %v376
  %832 = vmatpush.bf16.msra.mxu0 %v373
  %833 = vmatmul.bf16.gmra.mxu0 %v811
  %v834 = vpop.f32.mrf.mxu0
  %v835 = vadd.f32 %v243, %v834
  %v836 = vpop.f32.mrf.mxu0
  %837 = vdwg.mxu0
  %838 = vmatpush.bf16.msra.mxu0 %v395
  %839 = vmatpush.bf16.msra.mxu0 %v392
  %840 = vmatpush.bf16.msra.mxu0 %v389
  %841 = vmatpush.bf16.msra.mxu0 %v386
  %842 = vmatpush.bf16.msra.mxu0 %v383
  %843 = vmatpush.bf16.msra.mxu0 %v380
  %844 = vmatpush.bf16.msra.mxu0 %v377
  %845 = vmatpush.bf16.msra.mxu0 %v374
  %846 = vmatmul.bf16.gmra.mxu0 %v811
  %v847 = vpop.f32.mrf.mxu0
  %v848 = vadd.f32 %v244, %v847
  %v849 = vpop.f32.mrf.mxu0
  %850 = vdwg.mxu0
  %v851 = vadd.f32 %v808, %v822
  %v852 = vxor.u32 %v851, 2147483648
  %v853 = vmul.f32 %v852, 1.442695
  %v854 = vpow.pop %v853
  %v855 = vadd.f32 %v854, 1.0
  %v856 = vrcp.pop %v855
  %v857 = vmul.f32 %v855, %v856
  %v858 = vsub.f32 1.0, %v857
  %v859 = vmul.f32 %v856, %v858
  %v860 = vadd.f32 %v856, %v859
  %vm861 = vweird.f32 %v855
  %vm862 = vweird.f32 %v856
  %vm863 = vmor %vm861, %vm862
  %v864 = vsel %vm863, %v856, %v860
  %v865 = vand.u32 2147483647, %v855
  %vm866 = vcmp.eq.f32.partialorder %v865, 8.507059e+37
  %v867 = vand.u32 %v855, 2147483648
  %v868 = vor.u32 1.1754944e-38, %v867
  %v869 = vsel %vm866, %v868, %v864
  %v870 = vmul.f32 1.0, %v869
  %v871 = vadd.f32 %v809, %v835
  %v872 = vxor.u32 %v871, 2147483648
  %v873 = vmul.f32 %v872, 1.442695
  %v874 = vpow.pop %v873
  %v875 = vadd.f32 %v874, 1.0
  %v876 = vrcp.pop %v875
  %v877 = vmul.f32 %v875, %v876
  %v878 = vsub.f32 1.0, %v877
  %v879 = vmul.f32 %v876, %v878
  %v880 = vadd.f32 %v876, %v879
  %vm881 = vweird.f32 %v875
  %vm882 = vweird.f32 %v876
  %vm883 = vmor %vm881, %vm882
  %v884 = vsel %vm883, %v876, %v880
  %v885 = vand.u32 2147483647, %v875
  %vm886 = vcmp.eq.f32.partialorder %v885, 8.507059e+37
  %v887 = vand.u32 %v875, 2147483648
  %v888 = vor.u32 1.1754944e-38, %v887
  %v889 = vsel %vm886, %v888, %v884
  %v890 = vmul.f32 1.0, %v889
  %v891 = vmul.f32 %v870, %v848
  %v892 = vadd.f32 %v810, %v891
  %v893 = vtanh.pop %v892
  %v894 = vsub.f32 1.0, %v890
  %v895 = vmul.f32 %v894, %v893
  %v896 = vmul.f32 %v890, %v799
  %v897 = vadd.f32 %v895, %v896
  %v898 = vmul.f32 %v897, %v250
  %899 = vadd.xlane.f32.xlu0 %v898
  %v900 = vpop.xlane.xlu0 %899
  %vm901 = vcmp.eq.s32.totalorder %v253, 4
  %v902 = vsel %vm901, %v900, %v804
  %s903 = smul.u32 5, 3
  %s904 = smul.addr %s903, 8
  %s905 = scalar_lea.vmem [#allocation2], %s904
  %v906 = vld [vmem:[%s905] sm:$0xff]
  %v907 = vld [vmem:[%s905 + $0x8] sm:$0xff]
  %v908 = vld [vmem:[%s905 + $0x10] sm:$0xff]
  %v909 = vpack.c.bf16 %v897, %v897
  %910 = vmatpush.bf16.msra.mxu0 %v393
  %911 = vmatpush.bf16.msra.mxu0 %v390
  %912 = vmatpush.bf16.msra.mxu0 %v387
  %913 = vmatpush.bf16.msra.mxu0 %v384
  %914 = vmatpush.bf16.msra.mxu0 %v381
  %915 = vmatpush.bf16.msra.mxu0 %v378
  %916 = vmatpush.bf16.msra.mxu0 %v375
  %917 = vmatpush.bf16.msra.mxu0 %v372
  %918 = vmatmul.bf16.gmra.mxu0 %v909
  %v919 = vpop.f32.mrf.mxu0
  %v920 = vadd.f32 %v242, %v919
  %v921 = vpop.f32.mrf.mxu0
  %922 = vdwg.mxu0
  %923 = vmatpush.bf16.msra.mxu0 %v394
  %924 = vmatpush.bf16.msra.mxu0 %v391
  %925 = vmatpush.bf16.msra.mxu0 %v388
  %926 = vmatpush.bf16.msra.mxu0 %v385
  %927 = vmatpush.bf16.msra.mxu0 %v382
  %928 = vmatpush.bf16.msra.mxu0 %v379
  %929 = vmatpush.bf16.msra.mxu0 %v376
  %930 = vmatpush.bf16.msra.mxu0 %v373
  %931 = vmatmul.bf16.gmra.mxu0 %v909
  %v932 = vpop.f32.mrf.mxu0
  %v933 = vadd.f32 %v243, %v932
  %v934 = vpop.f32.mrf.mxu0
  %935 = vdwg.mxu0
  %936 = vmatpush.bf16.msra.mxu0 %v395
  %937 = vmatpush.bf16.msra.mxu0 %v392
  %938 = vmatpush.bf16.msra.mxu0 %v389
  %939 = vmatpush.bf16.msra.mxu0 %v386
  %940 = vmatpush.bf16.msra.mxu0 %v383
  %941 = vmatpush.bf16.msra.mxu0 %v380
  %942 = vmatpush.bf16.msra.mxu0 %v377
  %943 = vmatpush.bf16.msra.mxu0 %v374
  %944 = vmatmul.bf16.gmra.mxu0 %v909
  %v945 = vpop.f32.mrf.mxu0
  %v946 = vadd.f32 %v244, %v945
  %v947 = vpop.f32.mrf.mxu0
  %948 = vdwg.mxu0
  %v949 = vadd.f32 %v906, %v920
  %v950 = vxor.u32 %v949, 2147483648
  %v951 = vmul.f32 %v950, 1.442695
  %v952 = vpow.pop %v951
  %v953 = vadd.f32 %v952, 1.0
  %v954 = vrcp.pop %v953
  %v955 = vmul.f32 %v953, %v954
  %v956 = vsub.f32 1.0, %v955
  %v957 = vmul.f32 %v954, %v956
  %v958 = vadd.f32 %v954, %v957
  %vm959 = vweird.f32 %v953
  %vm960 = vweird.f32 %v954
  %vm961 = vmor %vm959, %vm960
  %v962 = vsel %vm961, %v954, %v958
  %v963 = vand.u32 2147483647, %v953
  %vm964 = vcmp.eq.f32.partialorder %v963, 8.507059e+37
  %v965 = vand.u32 %v953, 2147483648
  %v966 = vor.u32 1.1754944e-38, %v965
  %v967 = vsel %vm964, %v966, %v962
  %v968 = vmul.f32 1.0, %v967
  %v969 = vadd.f32 %v907, %v933
  %v970 = vxor.u32 %v969, 2147483648
  %v971 = vmul.f32 %v970, 1.442695
  %v972 = vpow.pop %v971
  %v973 = vadd.f32 %v972, 1.0
  %v974 = vrcp.pop %v973
  %v975 = vmul.f32 %v973, %v974
  %v976 = vsub.f32 1.0, %v975
  %v977 = vmul.f32 %v974, %v976
  %v978 = vadd.f32 %v974, %v977
  %vm979 = vweird.f32 %v973
  %vm980 = vweird.f32 %v974
  %vm981 = vmor %vm979, %vm980
  %v982 = vsel %vm981, %v974, %v978
  %v983 = vand.u32 2147483647, %v973
  %vm984 = vcmp.eq.f32.partialorder %v983, 8.507059e+37
  %v985 = vand.u32 %v973, 2147483648
  %v986 = vor.u32 1.1754944e-38, %v985
  %v987 = vsel %vm984, %v986, %v982
  %v988 = vmul.f32 1.0, %v987
  %v989 = vmul.f32 %v968, %v946
  %v990 = vadd.f32 %v908, %v989
  %v991 = vtanh.pop %v990
  %v992 = vsub.f32 1.0, %v988
  %v993 = vmul.f32 %v992, %v991
  %v994 = vmul.f32 %v988, %v897
  %v995 = vadd.f32 %v993, %v994
  %v996 = vmul.f32 %v995, %v250
  %997 = vadd.xlane.f32.xlu0 %v996
  %v998 = vpop.xlane.xlu0 %997
  %vm999 = vcmp.eq.s32.totalorder %v253, 5
  %v1000 = vsel %vm999, %v998, %v902
  %s1001 = smul.u32 6, 3
  %s1002 = smul.addr %s1001, 8
  %s1003 = scalar_lea.vmem [#allocation2], %s1002
  %v1004 = vld [vmem:[%s1003] sm:$0xff]
  %v1005 = vld [vmem:[%s1003 + $0x8] sm:$0xff]
  %v1006 = vld [vmem:[%s1003 + $0x10] sm:$0xff]
  %v1007 = vpack.c.bf16 %v995, %v995
  %1008 = vmatpush.bf16.msra.mxu0 %v393
  %1009 = vmatpush.bf16.msra.mxu0 %v390
  %1010 = vmatpush.bf16.msra.mxu0 %v387
  %1011 = vmatpush.bf16.msra.mxu0 %v384
  %1012 = vmatpush.bf16.msra.mxu0 %v381
  %1013 = vmatpush.bf16.msra.mxu0 %v378
  %1014 = vmatpush.bf16.msra.mxu0 %v375
  %1015 = vmatpush.bf16.msra.mxu0 %v372
  %1016 = vmatmul.bf16.gmra.mxu0 %v1007
  %v1017 = vpop.f32.mrf.mxu0
  %v1018 = vadd.f32 %v242, %v1017
  %v1019 = vpop.f32.mrf.mxu0
  %1020 = vdwg.mxu0
  %1021 = vmatpush.bf16.msra.mxu0 %v394
  %1022 = vmatpush.bf16.msra.mxu0 %v391
  %1023 = vmatpush.bf16.msra.mxu0 %v388
  %1024 = vmatpush.bf16.msra.mxu0 %v385
  %1025 = vmatpush.bf16.msra.mxu0 %v382
  %1026 = vmatpush.bf16.msra.mxu0 %v379
  %1027 = vmatpush.bf16.msra.mxu0 %v376
  %1028 = vmatpush.bf16.msra.mxu0 %v373
  %1029 = vmatmul.bf16.gmra.mxu0 %v1007
  %v1030 = vpop.f32.mrf.mxu0
  %v1031 = vadd.f32 %v243, %v1030
  %v1032 = vpop.f32.mrf.mxu0
  %1033 = vdwg.mxu0
  %1034 = vmatpush.bf16.msra.mxu0 %v395
  %1035 = vmatpush.bf16.msra.mxu0 %v392
  %1036 = vmatpush.bf16.msra.mxu0 %v389
  %1037 = vmatpush.bf16.msra.mxu0 %v386
  %1038 = vmatpush.bf16.msra.mxu0 %v383
  %1039 = vmatpush.bf16.msra.mxu0 %v380
  %1040 = vmatpush.bf16.msra.mxu0 %v377
  %1041 = vmatpush.bf16.msra.mxu0 %v374
  %1042 = vmatmul.bf16.gmra.mxu0 %v1007
  %v1043 = vpop.f32.mrf.mxu0
  %v1044 = vadd.f32 %v244, %v1043
  %v1045 = vpop.f32.mrf.mxu0
  %1046 = vdwg.mxu0
  %v1047 = vadd.f32 %v1004, %v1018
  %v1048 = vxor.u32 %v1047, 2147483648
  %v1049 = vmul.f32 %v1048, 1.442695
  %v1050 = vpow.pop %v1049
  %v1051 = vadd.f32 %v1050, 1.0
  %v1052 = vrcp.pop %v1051
  %v1053 = vmul.f32 %v1051, %v1052
  %v1054 = vsub.f32 1.0, %v1053
  %v1055 = vmul.f32 %v1052, %v1054
  %v1056 = vadd.f32 %v1052, %v1055
  %vm1057 = vweird.f32 %v1051
  %vm1058 = vweird.f32 %v1052
  %vm1059 = vmor %vm1057, %vm1058
  %v1060 = vsel %vm1059, %v1052, %v1056
  %v1061 = vand.u32 2147483647, %v1051
  %vm1062 = vcmp.eq.f32.partialorder %v1061, 8.507059e+37
  %v1063 = vand.u32 %v1051, 2147483648
  %v1064 = vor.u32 1.1754944e-38, %v1063
  %v1065 = vsel %vm1062, %v1064, %v1060
  %v1066 = vmul.f32 1.0, %v1065
  %v1067 = vadd.f32 %v1005, %v1031
  %v1068 = vxor.u32 %v1067, 2147483648
  %v1069 = vmul.f32 %v1068, 1.442695
  %v1070 = vpow.pop %v1069
  %v1071 = vadd.f32 %v1070, 1.0
  %v1072 = vrcp.pop %v1071
  %v1073 = vmul.f32 %v1071, %v1072
  %v1074 = vsub.f32 1.0, %v1073
  %v1075 = vmul.f32 %v1072, %v1074
  %v1076 = vadd.f32 %v1072, %v1075
  %vm1077 = vweird.f32 %v1071
  %vm1078 = vweird.f32 %v1072
  %vm1079 = vmor %vm1077, %vm1078
  %v1080 = vsel %vm1079, %v1072, %v1076
  %v1081 = vand.u32 2147483647, %v1071
  %vm1082 = vcmp.eq.f32.partialorder %v1081, 8.507059e+37
  %v1083 = vand.u32 %v1071, 2147483648
  %v1084 = vor.u32 1.1754944e-38, %v1083
  %v1085 = vsel %vm1082, %v1084, %v1080
  %v1086 = vmul.f32 1.0, %v1085
  %v1087 = vmul.f32 %v1066, %v1044
  %v1088 = vadd.f32 %v1006, %v1087
  %v1089 = vtanh.pop %v1088
  %v1090 = vsub.f32 1.0, %v1086
  %v1091 = vmul.f32 %v1090, %v1089
  %v1092 = vmul.f32 %v1086, %v995
  %v1093 = vadd.f32 %v1091, %v1092
  %v1094 = vmul.f32 %v1093, %v250
  %1095 = vadd.xlane.f32.xlu0 %v1094
  %v1096 = vpop.xlane.xlu0 %1095
  %vm1097 = vcmp.eq.s32.totalorder %v253, 6
  %v1098 = vsel %vm1097, %v1096, %v1000
  %s1099 = smul.u32 7, 3
  %s1100 = smul.addr %s1099, 8
  %s1101 = scalar_lea.vmem [#allocation2], %s1100
  %v1102 = vld [vmem:[%s1101] sm:$0xff]
  %v1103 = vld [vmem:[%s1101 + $0x8] sm:$0xff]
  %v1104 = vld [vmem:[%s1101 + $0x10] sm:$0xff]
  %v1105 = vpack.c.bf16 %v1093, %v1093
  %1106 = vmatpush.bf16.msra.mxu0 %v393
  %1107 = vmatpush.bf16.msra.mxu0 %v390
  %1108 = vmatpush.bf16.msra.mxu0 %v387
  %1109 = vmatpush.bf16.msra.mxu0 %v384
  %1110 = vmatpush.bf16.msra.mxu0 %v381
  %1111 = vmatpush.bf16.msra.mxu0 %v378
  %1112 = vmatpush.bf16.msra.mxu0 %v375
  %1113 = vmatpush.bf16.msra.mxu0 %v372
  %1114 = vmatmul.bf16.gmra.mxu0 %v1105
  %v1115 = vpop.f32.mrf.mxu0
  %v1116 = vadd.f32 %v242, %v1115
  %v1117 = vpop.f32.mrf.mxu0
  %1118 = vdwg.mxu0
  %1119 = vmatpush.bf16.msra.mxu0 %v394
  %1120 = vmatpush.bf16.msra.mxu0 %v391
  %1121 = vmatpush.bf16.msra.mxu0 %v388
  %1122 = vmatpush.bf16.msra.mxu0 %v385
  %1123 = vmatpush.bf16.msra.mxu0 %v382
  %1124 = vmatpush.bf16.msra.mxu0 %v379
  %1125 = vmatpush.bf16.msra.mxu0 %v376
  %1126 = vmatpush.bf16.msra.mxu0 %v373
  %1127 = vmatmul.bf16.gmra.mxu0 %v1105
  %v1128 = vpop.f32.mrf.mxu0
  %v1129 = vadd.f32 %v243, %v1128
  %v1130 = vpop.f32.mrf.mxu0
  %1131 = vdwg.mxu0
  %1132 = vmatpush.bf16.msra.mxu0 %v395
  %1133 = vmatpush.bf16.msra.mxu0 %v392
  %1134 = vmatpush.bf16.msra.mxu0 %v389
  %1135 = vmatpush.bf16.msra.mxu0 %v386
  %1136 = vmatpush.bf16.msra.mxu0 %v383
  %1137 = vmatpush.bf16.msra.mxu0 %v380
  %1138 = vmatpush.bf16.msra.mxu0 %v377
  %1139 = vmatpush.bf16.msra.mxu0 %v374
  %1140 = vmatmul.bf16.gmra.mxu0 %v1105
  %v1141 = vpop.f32.mrf.mxu0
  %v1142 = vadd.f32 %v244, %v1141
  %v1143 = vpop.f32.mrf.mxu0
  %1144 = vdwg.mxu0
  %v1145 = vadd.f32 %v1102, %v1116
  %v1146 = vxor.u32 %v1145, 2147483648
  %v1147 = vmul.f32 %v1146, 1.442695
  %v1148 = vpow.pop %v1147
  %v1149 = vadd.f32 %v1148, 1.0
  %v1150 = vrcp.pop %v1149
  %v1151 = vmul.f32 %v1149, %v1150
  %v1152 = vsub.f32 1.0, %v1151
  %v1153 = vmul.f32 %v1150, %v1152
  %v1154 = vadd.f32 %v1150, %v1153
  %vm1155 = vweird.f32 %v1149
  %vm1156 = vweird.f32 %v1150
  %vm1157 = vmor %vm1155, %vm1156
  %v1158 = vsel %vm1157, %v1150, %v1154
  %v1159 = vand.u32 2147483647, %v1149
  %vm1160 = vcmp.eq.f32.partialorder %v1159, 8.507059e+37
  %v1161 = vand.u32 %v1149, 2147483648
  %v1162 = vor.u32 1.1754944e-38, %v1161
  %v1163 = vsel %vm1160, %v1162, %v1158
  %v1164 = vmul.f32 1.0, %v1163
  %v1165 = vadd.f32 %v1103, %v1129
  %v1166 = vxor.u32 %v1165, 2147483648
  %v1167 = vmul.f32 %v1166, 1.442695
  %v1168 = vpow.pop %v1167
  %v1169 = vadd.f32 %v1168, 1.0
  %v1170 = vrcp.pop %v1169
  %v1171 = vmul.f32 %v1169, %v1170
  %v1172 = vsub.f32 1.0, %v1171
  %v1173 = vmul.f32 %v1170, %v1172
  %v1174 = vadd.f32 %v1170, %v1173
  %vm1175 = vweird.f32 %v1169
  %vm1176 = vweird.f32 %v1170
  %vm1177 = vmor %vm1175, %vm1176
  %v1178 = vsel %vm1177, %v1170, %v1174
  %v1179 = vand.u32 2147483647, %v1169
  %vm1180 = vcmp.eq.f32.partialorder %v1179, 8.507059e+37
  %v1181 = vand.u32 %v1169, 2147483648
  %v1182 = vor.u32 1.1754944e-38, %v1181
  %v1183 = vsel %vm1180, %v1182, %v1178
  %v1184 = vmul.f32 1.0, %v1183
  %v1185 = vmul.f32 %v1164, %v1142
  %v1186 = vadd.f32 %v1104, %v1185
  %v1187 = vtanh.pop %v1186
  %v1188 = vsub.f32 1.0, %v1184
  %v1189 = vmul.f32 %v1188, %v1187
  %v1190 = vmul.f32 %v1184, %v1093
  %v1191 = vadd.f32 %v1189, %v1190
  %v1192 = vmul.f32 %v1191, %v250
  %1193 = vadd.xlane.f32.xlu0 %v1192
  %v1194 = vpop.xlane.xlu0 %1193
  %vm1195 = vcmp.eq.s32.totalorder %v253, 7
  %v1196 = vsel %vm1195, %v1194, %v1098
  %v1197 = vld [vmem:[#allocation3] sm:$0x1]
  %v1199 = vperm.slane %v1197, 0
  %1200 = vset.pattern.permute.xlu0 0
  %1201 = vperm.xlu0 %1200, %v1199
  %v1202 = vpop.permute.xlu0 %1201
  %v1204 = vadd.f32 %v1196, %v1202
  %v1205 = vxor.u32 %v1204, 2147483648
  %v1206 = vmul.f32 %v1205, 1.442695
  %v1207 = vpow.pop %v1206
  %v1208 = vadd.f32 %v1207, 1.0
  %v1209 = vrcp.pop %v1208
  %v1210 = vmul.f32 %v1208, %v1209
  %v1211 = vsub.f32 1.0, %v1210
  %v1212 = vmul.f32 %v1209, %v1211
  %v1213 = vadd.f32 %v1209, %v1212
  %vm1214 = vweird.f32 %v1208
  %vm1215 = vweird.f32 %v1209
  %vm1216 = vmor %vm1214, %vm1215
  %v1217 = vsel %vm1216, %v1209, %v1213
  %v1218 = vand.u32 2147483647, %v1208
  %vm1219 = vcmp.eq.f32.partialorder %v1218, 8.507059e+37
  %v1220 = vand.u32 %v1208, 2147483648
  %v1221 = vor.u32 1.1754944e-38, %v1220
  %v1222 = vsel %vm1219, %v1221, %v1217
  %v1223 = vmul.f32 1.0, %v1222
  %1224 = vst [vmem:[%s7] sm:$0xff] %v1223
  // Predicated region
  $region30: #{ap_gru_lag_late_forward.1} parent=0 // pred_check
    _
  $region31: #{ap_gru_lag_late_forward.1} parent=0 // pred_check_branch
    %1226 = sbr.rel (0) target = $region33
  $region32: #{ap_gru_lag_late_forward.1} parent=0 // pred_region
    _
  $region33: #{ap_gru_lag_late_forward.1} parent=0 // pred_fallthru
    _
  // Predicated region
  $region34: #{ap_gru_lag_late_forward.1} parent=0 // pred_check
    _
  $region35: #{ap_gru_lag_late_forward.1} parent=0 // pred_check_branch
    %1228 = sbr.rel (0) target = $region37
  $region36: #{ap_gru_lag_late_forward.1} parent=0 // pred_region
    _
  $region37: #{ap_gru_lag_late_forward.1} parent=0 // pred_fallthru
    _

</llo_original>
